<compile_context>
chip_gen: v5e
topology: v5e:2x2
jax: 0.10.0
libtpu: 0.0.40
codegen_flags: <defaults>
</compile_context>

<pallas_src>
import functools

import jax
import jax.numpy as jnp
from jax.experimental import pallas as pl
from jax.experimental.pallas import tpu as pltpu

EPS = 1e-5
LANE = 128            # channel dims padded to a multiple of this (lane width)
SUB = 8               # f32 sublane tile; stats slots are 8 rows per grid step
VMEM_LIMIT = 48 << 20  # fits v7x's 64 MiB physical VMEM with headroom


def _round_up(v, m):
    return ((v + m - 1) // m) * m


# ----------------------------- Pallas kernels ------------------------------

def _stats_rows(y):
    """Per-channel partial sum / sum-of-squares packed into an (8, C) slab."""
    s = jnp.sum(y, axis=0, keepdims=True)
    q = jnp.sum(y * y, axis=0, keepdims=True)
    row = jax.lax.broadcasted_iota(jnp.int32, (SUB, y.shape[1]), 0)
    return jnp.where(row == 0, s, jnp.where(row == 1, q, 0.0))


def _conv_stats_kernel(relu_first, p_ref, w_ref, y_ref, st_ref):
    """Row tile: conv as matmul (bf16 in, f32 acc), optional ReLU, partial stats."""
    y = jnp.dot(p_ref[...], w_ref[...], preferred_element_type=jnp.float32)
    if relu_first:
        y = jnp.maximum(y, 0.0)
    y_ref[...] = y
    st_ref[...] = _stats_rows(y)


def _conv2_shortcut_stats_kernel(p2_ref, w2_ref, psc_ref, wsc_ref,
                                 y2_ref, st2_ref, ysc_ref, stsc_ref):
    """conv2 and the 1x1 projection conv on the same row tile, with their stats."""
    y2 = jnp.dot(p2_ref[...], w2_ref[...], preferred_element_type=jnp.float32)
    y2_ref[...] = y2
    st2_ref[...] = _stats_rows(y2)
    ysc = jnp.dot(psc_ref[...], wsc_ref[...], preferred_element_type=jnp.float32)
    ysc_ref[...] = ysc
    stsc_ref[...] = _stats_rows(ysc)


def _affine_kernel(relu_after, y_ref, a_ref, b_ref, z_ref):
    """z = a*y + b (BN affine, per channel), optional ReLU; bf16 out for next matmul."""
    z = y_ref[...] * a_ref[...] + b_ref[...]
    if relu_after:
        z = jnp.maximum(z, 0.0)
    z_ref[...] = z.astype(z_ref.dtype)


def _bn_add_relu_proj_kernel(y2_ref, a2_ref, b2_ref, ysc_ref, asc_ref, bsc_ref,
                             o_ref):
    main = y2_ref[...] * a2_ref[...] + b2_ref[...]
    res = ysc_ref[...] * asc_ref[...] + bsc_ref[...]
    o_ref[...] = jnp.maximum(main + res, 0.0)


def _bn_add_relu_id_kernel(y2_ref, a2_ref, b2_ref, res_ref, o_ref):
    main = y2_ref[...] * a2_ref[...] + b2_ref[...]
    o_ref[...] = jnp.maximum(main + res_ref[...], 0.0)


# --------------------------- pallas_call wrappers ---------------------------

def _tile_spec(tm, c):
    return pl.BlockSpec((tm, c), lambda i: (i, 0))


def _resident_spec(shape):
    return pl.BlockSpec(shape, lambda i: (0, 0))


def _slot_spec(c):
    return pl.BlockSpec((SUB, c), lambda i: (i, 0))


def _pcall(kernel, nt, in_specs, out_specs, out_shape, flops, bytes_accessed):
    return pl.pallas_call(
        kernel,
        grid=(nt,),
        in_specs=in_specs,
        out_specs=out_specs,
        out_shape=out_shape,
        compiler_params=pltpu.CompilerParams(
            dimension_semantics=("parallel",),
            vmem_limit_bytes=VMEM_LIMIT),
        cost_estimate=pl.CostEstimate(flops=int(flops), transcendentals=0,
                                      bytes_accessed=int(bytes_accessed)),
    )


def _conv_stats(p, w, relu_first, tm):
    mp, kkc = p.shape
    cp = w.shape[1]
    nt = mp // tm
    call = _pcall(
        functools.partial(_conv_stats_kernel, relu_first), nt,
        in_specs=[_tile_spec(tm, kkc), _resident_spec((kkc, cp))],
        out_specs=[_tile_spec(tm, cp), _slot_spec(cp)],
        out_shape=[jax.ShapeDtypeStruct((mp, cp), jnp.float32),
                   jax.ShapeDtypeStruct((nt * SUB, cp), jnp.float32)],
        flops=2 * mp * kkc * cp,
        bytes_accessed=2 * (mp * kkc + kkc * cp) + 4 * (mp * cp + nt * SUB * cp))
    return call(p, w)


def _conv2_shortcut_stats(p2, w2, psc, wsc, tm):
    mp, kkc = p2.shape
    cin_p = psc.shape[1]
    cp = w2.shape[1]
    nt = mp // tm
    call = _pcall(
        _conv2_shortcut_stats_kernel, nt,
        in_specs=[_tile_spec(tm, kkc), _resident_spec((kkc, cp)),
                  _tile_spec(tm, cin_p), _resident_spec((cin_p, cp))],
        out_specs=[_tile_spec(tm, cp), _slot_spec(cp),
                   _tile_spec(tm, cp), _slot_spec(cp)],
        out_shape=[jax.ShapeDtypeStruct((mp, cp), jnp.float32),
                   jax.ShapeDtypeStruct((nt * SUB, cp), jnp.float32),
                   jax.ShapeDtypeStruct((mp, cp), jnp.float32),
                   jax.ShapeDtypeStruct((nt * SUB, cp), jnp.float32)],
        flops=2 * mp * (kkc + cin_p) * cp,
        bytes_accessed=(2 * (mp * (kkc + cin_p) + (kkc + cin_p) * cp)
                        + 8 * (mp * cp + nt * SUB * cp)))
    return call(p2, w2, psc, wsc)


def _affine(y, a, b, relu_after, tm, out_dtype):
    mp, cp = y.shape
    nt = mp // tm
    call = _pcall(
        functools.partial(_affine_kernel, relu_after), nt,
        in_specs=[_tile_spec(tm, cp), _resident_spec((1, cp)),
                  _resident_spec((1, cp))],
        out_specs=_tile_spec(tm, cp),
        out_shape=jax.ShapeDtypeStruct((mp, cp), out_dtype),
        flops=2 * mp * cp,
        bytes_accessed=4 * mp * cp + 8 * cp
                       + jnp.dtype(out_dtype).itemsize * mp * cp)
    return call(y, a, b)


def _bn_add_relu_proj(y2, a2, b2, ysc, asc, bsc, tm):
    mp, cp = y2.shape
    nt = mp // tm
    call = _pcall(
        _bn_add_relu_proj_kernel, nt,
        in_specs=[_tile_spec(tm, cp), _resident_spec((1, cp)),
                  _resident_spec((1, cp)),
                  _tile_spec(tm, cp), _resident_spec((1, cp)),
                  _resident_spec((1, cp))],
        out_specs=_tile_spec(tm, cp),
        out_shape=jax.ShapeDtypeStruct((mp, cp), jnp.float32),
        flops=6 * mp * cp,
        bytes_accessed=12 * mp * cp + 16 * cp)
    return call(y2, a2, b2, ysc, asc, bsc)


def _bn_add_relu_id(y2, a2, b2, res, tm):
    mp, cp = y2.shape
    nt = mp // tm
    call = _pcall(
        _bn_add_relu_id_kernel, nt,
        in_specs=[_tile_spec(tm, cp), _resident_spec((1, cp)),
                  _resident_spec((1, cp)), _tile_spec(tm, cp)],
        out_specs=_tile_spec(tm, cp),
        out_shape=jax.ShapeDtypeStruct((mp, cp), jnp.float32),
        flops=4 * mp * cp,
        bytes_accessed=12 * mp * cp + 8 * cp)
    return call(y2, a2, b2, res)


# ------------------------------ JAX glue ------------------------------------

def _im2col(x_nhwc, k, stride, pad):
    """NHWC -> (N*Ho*Wo, K*K*C) patch matrix (plain-JAX glue)."""
    n, h, w, c = x_nhwc.shape
    xp = jnp.pad(x_nhwc, ((0, 0), (pad, pad), (pad, pad), (0, 0)))
    ho = (h + 2 * pad - k) // stride + 1
    wo = (w + 2 * pad - k) // stride + 1
    cols = []
    for kh in range(k):
        for kw in range(k):
            cols.append(jax.lax.slice(
                xp, (0, kh, kw, 0),
                (n, kh + (ho - 1) * stride + 1, kw + (wo - 1) * stride + 1, c),
                (1, stride, stride, 1)))
    p = jnp.stack(cols, axis=3)  # (n, ho, wo, k*k, c)
    return p.reshape(n * ho * wo, k * k * c), (n, ho, wo)


def _wmat_padded(w_oihw, cin_p, cout_p):
    """OIHW conv weight -> channel-padded (K*K*Cin_p, Cout_p) bf16 matmul weight."""
    cout, cin, kh, kw = w_oihw.shape
    w = jnp.transpose(w_oihw, (2, 3, 1, 0))  # (kh, kw, cin, cout)
    w = jnp.pad(w, ((0, 0), (0, 0), (0, cin_p - cin), (0, cout_p - cout)))
    return w.reshape(kh * kw * cin_p, cout_p).astype(jnp.bfloat16)


def _pad_rows(a, mp):
    return a if a.shape[0] == mp else jnp.pad(a, ((0, mp - a.shape[0]), (0, 0)))


def _pad_channels(x, cpad):
    c = x.shape[-1]
    if c == cpad:
        return x
    widths = [(0, 0)] * (x.ndim - 1) + [(0, cpad - c)]
    return jnp.pad(x, widths)


def _bn_affine(stats, gamma, beta, c_true, cp, m):
    """Fold cross-tile partial (sum, sumsq) into the per-channel BN affine a, b."""
    nt = stats.shape[0] // SUB
    st = stats.reshape(nt, SUB, cp)
    s = jnp.sum(st[:, 0], axis=0)
    q = jnp.sum(st[:, 1], axis=0)
    mean = s / m
    var = jnp.maximum(q / m - mean * mean, 0.0)   # biased var, f32 accumulators
    inv = jax.lax.rsqrt(var + EPS)
    g = jnp.pad(gamma.astype(jnp.float32), (0, cp - c_true))
    bt = jnp.pad(beta.astype(jnp.float32), (0, cp - c_true))
    a = g * inv
    b = bt - mean * a
    return a.reshape(1, cp), b.reshape(1, cp)


def basic_block_forward(x_nchw, params, stride=1, order="relu-bn",
                        inject=True, current_epoch=0, counter=0,
                        inject_index=0, tile_m=256):
    """Equivalent of BasicBlock.forward; returns (out_nchw, counter).

    tile_m: rows per grid step (N*Ho*Wo axis). Increase for big shapes on
    v5e/v6e (128 MiB VMEM); halve on v7x (64 MiB VMEM).
    """
    # TODO(synk): HansGruberNI fault injector not provided; treated as identity.
    in_planes = x_nchw.shape[1]
    planes = params["w1"].shape[0]
    cp = _round_up(planes, LANE)
    cin_p = _round_up(in_planes, LANE)

    x = jnp.transpose(x_nchw, (0, 2, 3, 1)).astype(jnp.float32)      # NHWC
    x_bf = _pad_channels(x, cin_p).astype(jnp.bfloat16)

    # ---- conv1 (3x3, stride, pad=1) + ReLU/BN1 (two-pass batch stats) ------
    p1, (n, ho, wo) = _im2col(x_bf, 3, stride, 1)
    m = n * ho * wo
    tm = min(tile_m, _round_up(m, 16))
    mp = _round_up(m, tm)            # zero rows contribute 0 to sum/sumsq
    p1 = _pad_rows(p1, mp)

    y1, st1 = _conv_stats(p1, _wmat_padded(params["w1"], cin_p, cp),
                          relu_first=(order == "relu-bn"), tm=tm)
    counter += 1                                           # ConvInjector #1
    a1, b1 = _bn_affine(st1, params["g1"], params["b1"], planes, cp, m)
    z1 = _affine(y1, a1, b1, relu_after=(order == "bn-relu"), tm=tm,
                 out_dtype=jnp.bfloat16)

    # ---- conv2 (3x3, stride=1, pad=1) [+ 1x1 projection shortcut] ----------
    z1_nhwc = z1[:m].reshape(n, ho, wo, cp)
    p2, _ = _im2col(z1_nhwc, 3, 1, 1)
    p2 = _pad_rows(p2, mp)
    w2 = _wmat_padded(params["w2"], cp, cp)

    has_shortcut = (stride != 1) or (in_planes != planes)
    if has_shortcut:
        psc, _ = _im2col(x_bf, 1, stride, 0)   # 1x1 conv patches == strided x
        psc = _pad_rows(psc, mp)
        y2, st2, ysc, stsc = _conv2_shortcut_stats(
            p2, w2, psc, _wmat_padded(params["wsc"], cin_p, cp), tm=tm)
        counter += 2                           # ConvInjector #2 + Shortcut conv
        a2, b2 = _bn_affine(st2, params["g2"], params["b2"], planes, cp, m)
        asc, bsc = _bn_affine(stsc, params["gsc"], params["bsc"], planes, cp, m)
        out = _bn_add_relu_proj(y2, a2, b2, ysc, asc, bsc, tm=tm)
    else:
        y2, st2 = _conv_stats(p2, w2, relu_first=False, tm=tm)
        counter += 1                           # ConvInjector #2
        a2, b2 = _bn_affine(st2, params["g2"], params["b2"], planes, cp, m)
        res = _pad_rows(_pad_channels(x, cp).reshape(m, cp), mp)
        out = _bn_add_relu_id(y2, a2, b2, res, tm=tm)

    out = out[:m, :planes].reshape(n, ho, wo, planes)
    return jnp.transpose(out, (0, 3, 1, 2)), counter


# --------------------------- pure-JAX reference -----------------------------

def _reference(x_nchw, params, stride, order):
    # Convs use bf16 operands with f32 accumulation, matching the kernels.
    def conv(x, w, s, p):
        return jax.lax.conv_general_dilated(
            x.astype(jnp.bfloat16), w.astype(jnp.bfloat16), (s, s),
            [(p, p), (p, p)], dimension_numbers=("NCHW", "OIHW", "NCHW"),
            preferred_element_type=jnp.float32)

    def bn(y, g, b):
        mean = jnp.mean(y, axis=(0, 2, 3), keepdims=True)
        var = jnp.mean(jnp.square(y - mean), axis=(0, 2, 3), keepdims=True)
        return ((y - mean) * jax.lax.rsqrt(var + EPS)
                * g.reshape(1, -1, 1, 1) + b.reshape(1, -1, 1, 1))

    out = conv(x_nchw, params["w1"], stride, 1)
    if order == "relu-bn":
        out = bn(jnp.maximum(out, 0.0), params["g1"], params["b1"])
    else:
        out = jnp.maximum(bn(out, params["g1"], params["b1"]), 0.0)
    out = bn(conv(out, params["w2"], 1, 1), params["g2"], params["b2"])
    in_planes, planes = x_nchw.shape[1], params["w1"].shape[0]
    if stride != 1 or in_planes != planes:
        sc = bn(conv(x_nchw, params["wsc"], stride, 0),
                params["gsc"], params["bsc"])
    else:
        sc = x_nchw
    return jnp.maximum(out + sc, 0.0)


# --------------------------------- main --------------------------------------

if __name__ == "__main__":
    key = jax.random.PRNGKey(0)
    ks = jax.random.split(key, 16)

    # Case 1: projection shortcut (in_planes != planes), order='relu-bn'.
    N, Cin, H, W = 2, 4, 16, 16
    planes, stride = 8, 1
    params = {
        "w1": 0.1 * jax.random.normal(ks[0], (planes, Cin, 3, 3), jnp.float32),
        "g1": 1.0 + 0.1 * jax.random.normal(ks[1], (planes,), jnp.float32),
        "b1": 0.1 * jax.random.normal(ks[2], (planes,), jnp.float32),
        "w2": 0.1 * jax.random.normal(ks[3], (planes, planes, 3, 3), jnp.float32),
        "g2": 1.0 + 0.1 * jax.random.normal(ks[4], (planes,), jnp.float32),
        "b2": 0.1 * jax.random.normal(ks[5], (planes,), jnp.float32),
        "wsc": 0.1 * jax.random.normal(ks[6], (planes, Cin, 1, 1), jnp.float32),
        "gsc": 1.0 + 0.1 * jax.random.normal(ks[7], (planes,), jnp.float32),
        "bsc": 0.1 * jax.random.normal(ks[8], (planes,), jnp.float32),
    }
    x = jax.random.normal(ks[9], (N, Cin, H, W), jnp.float32)

    out, counter = basic_block_forward(x, params, stride=stride, order="relu-bn")
    out = jax.block_until_ready(out)
    ref = jax.block_until_ready(_reference(x, params, stride, "relu-bn"))
    assert out.shape == (N, planes, H // stride, W // stride), out.shape
    assert counter == 3, counter
    err = float(jnp.max(jnp.abs(out - ref)))
    # bf16 matmul operands (matched in the reference) leave a few e-3 of noise.
    if err > 1e-2:
        raise RuntimeError(f"Pallas/reference mismatch (projection), err={err}")

    # Case 2: identity shortcut (in_planes == planes), order='bn-relu'.
    Cin2 = planes
    params2 = {
        "w1": 0.1 * jax.random.normal(ks[10], (planes, Cin2, 3, 3), jnp.float32),
        "g1": 1.0 + 0.1 * jax.random.normal(ks[11], (planes,), jnp.float32),
        "b1": 0.1 * jax.random.normal(ks[12], (planes,), jnp.float32),
        "w2": 0.1 * jax.random.normal(ks[13], (planes, planes, 3, 3), jnp.float32),
        "g2": 1.0 + 0.1 * jax.random.normal(ks[14], (planes,), jnp.float32),
        "b2": 0.1 * jax.random.normal(ks[15], (planes,), jnp.float32),
    }
    x2 = jax.random.normal(ks[9], (N, Cin2, H, W), jnp.float32)
    out2, counter2 = basic_block_forward(x2, params2, stride=1, order="bn-relu")
    out2 = jax.block_until_ready(out2)
    ref2 = jax.block_until_ready(_reference(x2, params2, 1, "bn-relu"))
    assert out2.shape == (N, planes, H, W), out2.shape
    assert counter2 == 2, counter2
    err2 = float(jnp.max(jnp.abs(out2 - ref2)))
    if err2 > 1e-2:
        raise RuntimeError(f"Pallas/reference mismatch (identity), err={err2}")

    print("KERNEL_OK")
</pallas_src>

<mosaic_0001>
module attributes {stable_mosaic.version = 11 : i64} {
  func.func @_conv_stats_kernel(%arg0: i32, %arg1: memref<256x1152xbf16, #tpu.memory_space<vmem>>, %arg2: memref<1152x128xbf16, #tpu.memory_space<vmem>>, %arg3: memref<256x128xf32, #tpu.memory_space<vmem>>, %arg4: memref<8x128xf32, #tpu.memory_space<vmem>>) attributes {dimension_semantics = [#tpu.dimension_semantics<parallel>], iteration_bounds = array<i64: 2>, scalar_prefetch = 0 : i64, scratch_operands = 0 : i64, tpu.core_type = #tpu.core_type<tc>, window_params = [{transform_indices = @transform_0, window_bounds = array<i64: 256, 1152>}, {pipeline_mode = #tpu.pipeline_mode<synchronous>, transform_indices = @transform_1, window_bounds = array<i64: 1152, 128>}, {transform_indices = @transform_2, window_bounds = array<i64: 256, 128>}, {transform_indices = @transform_3, window_bounds = array<i64: 8, 128>}]} {
    %c0 = arith.constant 0 : index
    %c0_0 = arith.constant 0 : index
    %0 = vector.load %arg1[%c0, %c0_0] : memref<256x1152xbf16, #tpu.memory_space<vmem>>, vector<256x1152xbf16>
    %c0_1 = arith.constant 0 : index
    %c0_2 = arith.constant 0 : index
    %1 = vector.load %arg2[%c0_1, %c0_2] : memref<1152x128xbf16, #tpu.memory_space<vmem>>, vector<1152x128xbf16>
    %cst = arith.constant dense<0.000000e+00> : vector<256x128xf32>
    %2 = tpu.matmul %0, %1, %cst {dimension_numbers = #tpu.dot_dimension_numbers<[1], [0], [0], [1], [0, 0, 1, 1], [], []>} : vector<256x1152xbf16>, vector<1152x128xbf16>, vector<256x128xf32> -> vector<256x128xf32>
    %cst_3 = arith.constant 0.000000e+00 : f32
    %3 = vector.broadcast %cst_3 : f32 to vector<256x128xf32>
    %4 = arith.maximumf %2, %3 : vector<256x128xf32>
    %c0_4 = arith.constant 0 : index
    %c0_5 = arith.constant 0 : index
    %5 = vector.load %arg3[%c0_4, %c0_5] : memref<256x128xf32, #tpu.memory_space<vmem>>, vector<256x128xf32>
    tpu.vector_store %arg3[%c0_4, %c0_5], %4 {strides = array<i32>} : memref<256x128xf32, #tpu.memory_space<vmem>>, vector<256x128xf32>,
    %cst_6 = arith.constant dense<0.000000e+00> : vector<128xf32>
    %6 = vector.multi_reduction <add>, %4, %cst_6 [0] : vector<256x128xf32> to vector<128xf32>
    %7 = vector.shape_cast %6 : vector<128xf32> to vector<1x128xf32>
    %8 = arith.mulf %4, %4 : vector<256x128xf32>
    %cst_7 = arith.constant dense<0.000000e+00> : vector<128xf32>
    %9 = vector.multi_reduction <add>, %8, %cst_7 [0] : vector<256x128xf32> to vector<128xf32>
    %10 = vector.shape_cast %9 : vector<128xf32> to vector<1x128xf32>
    %11 = tpu.iota {dimensions = array<i32: 0>} : vector<8x128xi32>
    %c0_i32 = arith.constant 0 : i32
    %12 = vector.broadcast %c0_i32 : i32 to vector<8x128xi32>
    %13 = arith.cmpi eq, %11, %12 : vector<8x128xi32>
    %c1_i32 = arith.constant 1 : i32
    %14 = vector.broadcast %c1_i32 : i32 to vector<8x128xi32>
    %15 = arith.cmpi eq, %11, %14 : vector<8x128xi32>
    %cst_8 = arith.constant 0.000000e+00 : f32
    %16 = vector.shape_cast %10 : vector<1x128xf32> to vector<1x128xf32>
    %17 = vector.broadcast %16 : vector<1x128xf32> to vector<8x128xf32>
    %18 = vector.broadcast %cst_8 : f32 to vector<8x128xf32>
    %19 = arith.select %15, %17, %18 : vector<8x128xi1>, vector<8x128xf32>
    %20 = vector.shape_cast %7 : vector<1x128xf32> to vector<1x128xf32>
    %21 = vector.broadcast %20 : vector<1x128xf32> to vector<8x128xf32>
    %22 = arith.select %13, %21, %19 : vector<8x128xi1>, vector<8x128xf32>
    %c0_9 = arith.constant 0 : index
    %c0_10 = arith.constant 0 : index
    %23 = vector.load %arg4[%c0_9, %c0_10] : memref<8x128xf32, #tpu.memory_space<vmem>>, vector<8x128xf32>
    tpu.vector_store %arg4[%c0_9, %c0_10], %22 {strides = array<i32>} : memref<8x128xf32, #tpu.memory_space<vmem>>, vector<8x128xf32>,
    return
  }
  func.func @transform_0(%arg0: i32) -> (i32, i32) {
    %c0_i32 = arith.constant 0 : i32
    %c0_i32_0 = arith.constant 0 : i32
    return %arg0, %c0_i32 : i32, i32
  }
  func.func @transform_1(%arg0: i32) -> (i32, i32) {
    %c0_i32 = arith.constant 0 : i32
    %c0_i32_0 = arith.constant 0 : i32
    %c0_i32_1 = arith.constant 0 : i32
    return %c0_i32, %c0_i32_0 : i32, i32
  }
  func.func @transform_2(%arg0: i32) -> (i32, i32) {
    %c0_i32 = arith.constant 0 : i32
    %c0_i32_0 = arith.constant 0 : i32
    return %arg0, %c0_i32 : i32, i32
  }
  func.func @transform_3(%arg0: i32) -> (i32, i32) {
    %c0_i32 = arith.constant 0 : i32
    %c0_i32_0 = arith.constant 0 : i32
    return %arg0, %c0_i32 : i32, i32
  }
}

</mosaic_0001>

<llo_original>
// kernel: tpu_custom_call.1
$region0: #{tpu_custom_call.1}
  #allocation0 [shape = 'u32[]', space=smem, size = 0x4, offset = 0x4, fixed_abs, tag = 'smem constant byte address 0x4 - core index']
  #allocation1 [shape = 'u32[72,128]{1,0:T(1,128)}', space=vmem, size = 0x9000, scoped, tag = 'internal scratch']
  %s0 = inlined_call_operand.hbm [shape: bf16[512,1152], index: 0, kind: input, shape index: {}]
  %s1 = inlined_call_operand.hbm [shape: bf16[1152,128], index: 1, kind: input, shape index: {}]
  %s2 = inlined_call_operand.hbm [shape: f32[512,128], index: 2, kind: output, shape index: {0}]
  %s3 = inlined_call_operand.hbm [shape: f32[16,128], index: 3, kind: output, shape index: {1}]
  %4 = xla_tuple %s2, %s3
  %s5 = sld [smem:[#allocation0]]
  $region57: #{tpu_custom_call.1} parent=0
    _
  %s7 = ssub.s32 1, %s5
  %s8 = scalar_select 0, %s7, %s5
  $region1: #{tpu_custom_call.1} parent=0
    #allocation2 [shape = 'u8[1179648]{0}', space=vmem, size = 0x120000, scoped, tag = 'input window, operand 0']
    #allocation3 [shape = 's32[2]{0}', space=sflag, size = 0x8, scoped, tag = 'scoped memory for tpu_custom_call.1']
    #allocation4 [shape = 's32[2]{0}', space=sflag, size = 0x8, scoped, tag = 'scoped memory for tpu_custom_call.1']
    #allocation5 [shape = 'u8[294912]{0}', space=vmem, size = 0x48000, scoped, tag = 'input window, operand 1, single buffered']
    #allocation6 [shape = 's32[1]{0}', space=sflag, size = 0x4, scoped, tag = 'scoped memory for tpu_custom_call.1']
    #allocation7 [shape = 'u8[262144]{0}', space=vmem, size = 0x40000, scoped, tag = 'output window, operand 0']
    #allocation8 [shape = 'u8[8192]{0}', space=vmem, size = 0x2000, scoped, tag = 'output window, operand 1']
    #allocation9 [shape = 's32[2]{0}', space=sflag, size = 0x8, scoped, tag = 'scoped memory for tpu_custom_call.1']
    %9 = vsyncpa [#allocation3], 0
    %s10 = scalar_lea.sflag [#allocation3], 1
    %11 = vsyncpa %s10, 0
    %12 = vsyncpa [#allocation6], 0
    %13 = vsyncpa [#allocation4], 0
    %s14 = scalar_lea.sflag [#allocation4], 1
    %15 = vsyncpa %s14, 0
    %16 = vsyncpa [#allocation9], 0
    %s17 = scalar_lea.sflag [#allocation9], 1
    %18 = vsyncpa %s17, 0
    loop: start=0, step=1, limit=4
    $region2: #{tpu_custom_call.1} parent=1 // loop_pre_header
      _
    $region3: #{tpu_custom_call.1} parent=1 // loop_header
      %s20 = sphi 0, %s24
      %p21 = scmp.ge.s32.totalorder %s20, 4
      %s30 = sphi 0, %s32
      %s33 = sphi 0, %s30
      %s34 = sphi 0, %s33
      %s50 = sphi 0, %s34
      %s54 = sphi 0, %s54
      %s56 = sphi 0, %s54
      %s57 = sphi 0, %s56
      %s71 = sphi 0, %s57
      %s77 = sphi 0, %s79
      %s80 = sphi 0, %s77
      %s81 = sphi 0, %s80
      %s97 = sphi 0, %s81
      %s103 = sphi 0, %s105
      %s106 = sphi 0, %s103
      %s107 = sphi 0, %s106
      %s123 = sphi 0, %s107
    $region4: #{tpu_custom_call.1} parent=1 // loop_header_branch
      %23 = sbr.rel (%p21) target = $region8
    $region5: #{tpu_custom_call.1} parent=1 // loop_body
      %s25 = ssub.s32 %s20, 1
      %s26 = ssub.s32 %s20, 2
      %s27 = sadd.s32 %s20, 1
      %s28 = ssub.s32 %s20, %s27
      %p29 = scmp.eq.s32.totalorder %s28, 0
      %s31 = sadd.s32 %s30, 1
      %s32 = scalar_select %p29, %s30, %s31
      %p35 = pneg %p29
      %p36 = scmp.eq.s32.totalorder %s20, 1
      %p37 = por %p35, %p36
      %p38 = scmp.ne.s32.totalorder %s30, %s33
      %p39 = scmp.eq.s32.totalorder %s20, 0
      %p40 = por %p38, %p39
      %p41 = scmp.ne.s32.totalorder %s30, %s33
      %p42 = scmp.eq.s32.totalorder %s25, 1
      %p43 = por %p41, %p42
      %p44 = scmp.ne.s32.totalorder %s33, %s34
      %p45 = scmp.eq.s32.totalorder %s25, 0
      %p46 = por %p44, %p45
      %p47 = scmp.ne.s32.totalorder %s33, %s34
      %p48 = scmp.eq.s32.totalorder %s26, 1
      %p49 = por %p47, %p48
      %p51 = scmp.ne.s32.totalorder %s34, %s50
      %p52 = scmp.eq.s32.totalorder %s26, 0
      %p53 = por %p51, %p52
      %s55 = sadd.s32 %s54, 1
      %p58 = scmp.eq.s32.totalorder %s20, 1
      %p59 = scmp.ne.s32.totalorder %s54, %s56
      %p60 = scmp.eq.s32.totalorder %s20, 0
      %p61 = por %p59, %p60
      %p62 = scmp.ne.s32.totalorder %s54, %s56
      %p63 = scmp.eq.s32.totalorder %s25, 1
      %p64 = por %p62, %p63
      %p65 = scmp.ne.s32.totalorder %s56, %s57
      %p66 = scmp.eq.s32.totalorder %s25, 0
      %p67 = por %p65, %p66
      %p68 = scmp.ne.s32.totalorder %s56, %s57
      %p69 = scmp.eq.s32.totalorder %s26, 1
      %p70 = por %p68, %p69
      %p72 = scmp.ne.s32.totalorder %s57, %s71
      %p73 = scmp.eq.s32.totalorder %s26, 0
      %p74 = por %p72, %p73
      %s75 = ssub.s32 %s20, %s27
      %p76 = scmp.eq.s32.totalorder %s75, 0
      %s78 = sadd.s32 %s77, 1
      %s79 = scalar_select %p76, %s77, %s78
      %p82 = pneg %p76
      %p83 = scmp.eq.s32.totalorder %s20, 1
      %p84 = por %p82, %p83
      %p85 = scmp.ne.s32.totalorder %s77, %s80
      %p86 = scmp.eq.s32.totalorder %s20, 0
      %p87 = por %p85, %p86
      %p88 = scmp.ne.s32.totalorder %s77, %s80
      %p89 = scmp.eq.s32.totalorder %s25, 1
      %p90 = por %p88, %p89
      %p91 = scmp.ne.s32.totalorder %s80, %s81
      %p92 = scmp.eq.s32.totalorder %s25, 0
      %p93 = por %p91, %p92
      %p94 = scmp.ne.s32.totalorder %s80, %s81
      %p95 = scmp.eq.s32.totalorder %s26, 1
      %p96 = por %p94, %p95
      %p98 = scmp.ne.s32.totalorder %s81, %s97
      %p99 = scmp.eq.s32.totalorder %s26, 0
      %p100 = por %p98, %p99
      %s101 = ssub.s32 %s20, %s27
      %p102 = scmp.eq.s32.totalorder %s101, 0
      %s104 = sadd.s32 %s103, 1
      %s105 = scalar_select %p102, %s103, %s104
      %p108 = pneg %p102
      %p109 = scmp.eq.s32.totalorder %s20, 1
      %p110 = por %p108, %p109
      %p111 = scmp.ne.s32.totalorder %s103, %s106
      %p112 = scmp.eq.s32.totalorder %s20, 0
      %p113 = por %p111, %p112
      %p114 = scmp.ne.s32.totalorder %s103, %s106
      %p115 = scmp.eq.s32.totalorder %s25, 1
      %p116 = por %p114, %p115
      %p117 = scmp.ne.s32.totalorder %s106, %s107
      %p118 = scmp.eq.s32.totalorder %s25, 0
      %p119 = por %p117, %p118
      %p120 = scmp.ne.s32.totalorder %s106, %s107
      %p121 = scmp.eq.s32.totalorder %s26, 1
      %p122 = por %p120, %p121
      %p124 = scmp.ne.s32.totalorder %s107, %s123
      %p125 = scmp.eq.s32.totalorder %s26, 0
      %p126 = por %p124, %p125
      %p127 = scmp.le.s32.totalorder 1, %s20
      %p128 = scmp.lt.s32.totalorder %s20, 3
      %p129 = pnand %p127, %p128
      %p130 = pneg %p129
      // Predicated region
      $region9: #{tpu_custom_call.1} parent=5 // pred_check
        _
      $region10: #{tpu_custom_call.1} parent=5 // pred_check_branch
        %132 = sbr.rel (%p129) target = $region12
      $region11: #{tpu_custom_call.1} parent=5 // pred_region
        %s133 = ssub.s32 %s20, 1
        // Predicated region
        $region13: #{tpu_custom_call.1} parent=11 // pred_check
          %p134 = pneg %p67
        $region14: #{tpu_custom_call.1} parent=11 // pred_check_branch
          %136 = sbr.rel (%p134) target = $region16
        $region15: #{tpu_custom_call.1} parent=11 // pred_region
          %138 = vsyncadd [#allocation6], 0
          %s139 = sshll.u32 %s1, 4
          %s140 = int_to_ptr.hbm [resolvable:$true] %s139
          %s141 = sshll.u32 [#allocation5], 4
          %s142 = int_to_ptr.vmem [resolvable:$true] %s141
          %147 = dma.hbm_to_vmem [thread:$0]  %s140, 9216, %s142, [#allocation6], 64, 64, 4
        $region16: #{tpu_custom_call.1} parent=11 // pred_fallthru
          _
      $region12: #{tpu_custom_call.1} parent=5 // pred_fallthru
        _
      %p148 = scmp.lt.s32.totalorder %s20, 2
      // Predicated region
      $region17: #{tpu_custom_call.1} parent=5 // pred_check
        %p149 = pneg %p148
      $region18: #{tpu_custom_call.1} parent=5 // pred_check_branch
        %151 = sbr.rel (%p149) target = $region20
      $region19: #{tpu_custom_call.1} parent=5 // pred_region
        // Predicated region
        $region21: #{tpu_custom_call.1} parent=19 // pred_check
          %p152 = pneg %p40
        $region22: #{tpu_custom_call.1} parent=19 // pred_check_branch
          %154 = sbr.rel (%p152) target = $region24
        $region23: #{tpu_custom_call.1} parent=19 // pred_region
          %s155 = sand.u32 %s30, 1
          %s156 = scalar_lea.sflag [#allocation3], %s155
          %s157 = sand.u32 %s30, 1
          %s158 = smul.addr %s157, 1152
          %s159 = scalar_lea.vmem [#allocation2], %s158
          %s160 = smul.u32 32, %s20
          %162 = vsyncadd %s156, 0
          %s163 = smul.addr %s160, 9
          %s164 = smul.addr %s163, 4
          %s165 = scalar_lea.hbm %s0, %s164
          %s166 = sshll.u32 %s165, 4
          %s167 = int_to_ptr.hbm [resolvable:$true] %s166
          %s168 = sshll.u32 %s159, 4
          %s169 = int_to_ptr.vmem [resolvable:$true] %s168
          %174 = dma.hbm_to_vmem [thread:$0]  %s167, 18432, %s169, %s156, 576, 576, 36
        $region24: #{tpu_custom_call.1} parent=19 // pred_fallthru
          _
      $region20: #{tpu_custom_call.1} parent=5 // pred_fallthru
        _
      %p175 = scmp.le.s32.totalorder 1, %s20
      %p176 = scmp.lt.s32.totalorder %s20, 3
      %p177 = pnand %p175, %p176
      %p178 = pneg %p177
      // Predicated region
      $region25: #{tpu_custom_call.1} parent=5 // pred_check
        _
      $region26: #{tpu_custom_call.1} parent=5 // pred_check_branch
        %180 = sbr.rel (%p177) target = $region28
      $region27: #{tpu_custom_call.1} parent=5 // pred_region
        %s181 = ssub.s32 %s20, 1
        %s182 = sand.u32 %s33, 1
        %s183 = scalar_lea.sflag [#allocation3], %s182
        %s184 = sand.u32 %s33, 1
        %s185 = smul.addr %s184, 1152
        %s186 = scalar_lea.vmem [#allocation2], %s185
        // Predicated region
        $region29: #{tpu_custom_call.1} parent=27 // pred_check
          %p187 = pneg %p46
        $region30: #{tpu_custom_call.1} parent=27 // pred_check_branch
          %189 = sbr.rel (%p187) target = $region32
        $region31: #{tpu_custom_call.1} parent=27 // pred_region
          %191 = dma.done %s183, 18432
        $region32: #{tpu_custom_call.1} parent=27 // pred_fallthru
          _
        // Predicated region
        $region33: #{tpu_custom_call.1} parent=27 // pred_check
          %p192 = pneg %p67
        $region34: #{tpu_custom_call.1} parent=27 // pred_check_branch
          %194 = sbr.rel (%p192) target = $region36
        $region35: #{tpu_custom_call.1} parent=27 // pred_region
          %196 = dma.done [#allocation6], 9216
        $region36: #{tpu_custom_call.1} parent=27 // pred_fallthru
          _
        %s197 = sand.u32 %s33, 1
        %s198 = scalar_lea.sflag [#allocation3], %s197
        %s199 = sand.u32 %s33, 1
        %s200 = smul.addr %s199, 1152
        %s201 = scalar_lea.vmem [#allocation2], %s200
        %p202 = pneg %p46
        %p203 = pneg %p43
        %p204 = pneg %p67
        %p205 = pneg %p64
        %p206 = pneg %p93
        %p207 = pneg %p90
        %s208 = sand.u32 %s80, 1
        %s209 = scalar_lea.sflag [#allocation4], %s208
        %s210 = sand.u32 %s80, 1
        %s211 = smul.addr %s210, 256
        %s212 = scalar_lea.vmem [#allocation7], %s211
        %p213 = pneg %p119
        %p214 = pneg %p116
        %s215 = sand.u32 %s106, 1
        %s216 = scalar_lea.sflag [#allocation9], %s215
        %s217 = sand.u32 %s106, 1
        %s218 = smul.addr %s217, 8
        %s219 = scalar_lea.vmem [#allocation8], %s218
        %s220 = smul.u32 32, %s25
        %s221 = smul.u32 32, %s25
        %v222 = vld [vmem:[%s186] sm:$0xff]
        %v223 = vld [vmem:[%s186 + $0x8] sm:$0xff]
        %v224 = vld [vmem:[%s186 + $0x10] sm:$0xff]
        %v225 = vld [vmem:[%s186 + $0x18] sm:$0xff]
        %v226 = vld [vmem:[%s186 + $0x20] sm:$0xf]
        %v227 = vld [vmem:[%s186 + $0x24] sm:$0xff]
        %v228 = vld [vmem:[%s186 + $0x2c] sm:$0xff]
        %v229 = vld [vmem:[%s186 + $0x34] sm:$0xff]
        %v230 = vld [vmem:[%s186 + $0x3c] sm:$0xff]
        %v231 = vld [vmem:[%s186 + $0x44] sm:$0xf]
        %v232 = vld [vmem:[%s186 + $0x48] sm:$0xff]
        %v233 = vld [vmem:[%s186 + $0x50] sm:$0xff]
        %v234 = vld [vmem:[%s186 + $0x58] sm:$0xff]
        %v235 = vld [vmem:[%s186 + $0x60] sm:$0xff]
        %v236 = vld [vmem:[%s186 + $0x68] sm:$0xf]
        %v237 = vld [vmem:[%s186 + $0x6c] sm:$0xff]
        %v238 = vld [vmem:[%s186 + $0x74] sm:$0xff]
        %v239 = vld [vmem:[%s186 + $0x7c] sm:$0xff]
        %v240 = vld [vmem:[%s186 + $0x84] sm:$0xff]
        %v241 = vld [vmem:[%s186 + $0x8c] sm:$0xf]
        %v242 = vld [vmem:[%s186 + $0x90] sm:$0xff]
        %v243 = vld [vmem:[%s186 + $0x98] sm:$0xff]
        %v244 = vld [vmem:[%s186 + $0xa0] sm:$0xff]
        %v245 = vld [vmem:[%s186 + $0xa8] sm:$0xff]
        %v246 = vld [vmem:[%s186 + $0xb0] sm:$0xf]
        %v247 = vld [vmem:[%s186 + $0xb4] sm:$0xff]
        %v248 = vld [vmem:[%s186 + $0xbc] sm:$0xff]
        %v249 = vld [vmem:[%s186 + $0xc4] sm:$0xff]
        %v250 = vld [vmem:[%s186 + $0xcc] sm:$0xff]
        %v251 = vld [vmem:[%s186 + $0xd4] sm:$0xf]
        %v252 = vld [vmem:[%s186 + $0xd8] sm:$0xff]
        %v253 = vld [vmem:[%s186 + $0xe0] sm:$0xff]
        %v254 = vld [vmem:[%s186 + $0xe8] sm:$0xff]
        %v255 = vld [vmem:[%s186 + $0xf0] sm:$0xff]
        %v256 = vld [vmem:[%s186 + $0xf8] sm:$0xf]
        %v257 = vld [vmem:[%s186 + $0xfc] sm:$0xff]
        %v258 = vld [vmem:[%s186 + $0x104] sm:$0xff]
        %v259 = vld [vmem:[%s186 + $0x10c] sm:$0xff]
        %v260 = vld [vmem:[%s186 + $0x114] sm:$0xff]
        %v261 = vld [vmem:[%s186 + $0x11c] sm:$0xf]
        %v262 = vld [vmem:[%s186 + $0x120] sm:$0xff]
        %v263 = vld [vmem:[%s186 + $0x128] sm:$0xff]
        %v264 = vld [vmem:[%s186 + $0x130] sm:$0xff]
        %v265 = vld [vmem:[%s186 + $0x138] sm:$0xff]
        %v266 = vld [vmem:[%s186 + $0x140] sm:$0xf]
        %v267 = vld [vmem:[%s186 + $0x144] sm:$0xff]
        %v268 = vld [vmem:[%s186 + $0x14c] sm:$0xff]
        %v269 = vld [vmem:[%s186 + $0x154] sm:$0xff]
        %v270 = vld [vmem:[%s186 + $0x15c] sm:$0xff]
        %v271 = vld [vmem:[%s186 + $0x164] sm:$0xf]
        %v272 = vld [vmem:[%s186 + $0x168] sm:$0xff]
        %v273 = vld [vmem:[%s186 + $0x170] sm:$0xff]
        %v274 = vld [vmem:[%s186 + $0x178] sm:$0xff]
        %v275 = vld [vmem:[%s186 + $0x180] sm:$0xff]
        %v276 = vld [vmem:[%s186 + $0x188] sm:$0xf]
        %v277 = vld [vmem:[%s186 + $0x18c] sm:$0xff]
        %v278 = vld [vmem:[%s186 + $0x194] sm:$0xff]
        %v279 = vld [vmem:[%s186 + $0x19c] sm:$0xff]
        %v280 = vld [vmem:[%s186 + $0x1a4] sm:$0xff]
        %v281 = vld [vmem:[%s186 + $0x1ac] sm:$0xf]
        %v282 = vld [vmem:[%s186 + $0x1b0] sm:$0xff]
        %v283 = vld [vmem:[%s186 + $0x1b8] sm:$0xff]
        %v284 = vld [vmem:[%s186 + $0x1c0] sm:$0xff]
        %v285 = vld [vmem:[%s186 + $0x1c8] sm:$0xff]
        %v286 = vld [vmem:[%s186 + $0x1d0] sm:$0xf]
        %v287 = vld [vmem:[%s186 + $0x1d4] sm:$0xff]
        %v288 = vld [vmem:[%s186 + $0x1dc] sm:$0xff]
        %v289 = vld [vmem:[%s186 + $0x1e4] sm:$0xff]
        %v290 = vld [vmem:[%s186 + $0x1ec] sm:$0xff]
        %v291 = vld [vmem:[%s186 + $0x1f4] sm:$0xf]
        %v292 = vld [vmem:[%s186 + $0x1f8] sm:$0xff]
        %v293 = vld [vmem:[%s186 + $0x200] sm:$0xff]
        %v294 = vld [vmem:[%s186 + $0x208] sm:$0xff]
        %v295 = vld [vmem:[%s186 + $0x210] sm:$0xff]
        %v296 = vld [vmem:[%s186 + $0x218] sm:$0xf]
        %v297 = vld [vmem:[%s186 + $0x21c] sm:$0xff]
        %v298 = vld [vmem:[%s186 + $0x224] sm:$0xff]
        %v299 = vld [vmem:[%s186 + $0x22c] sm:$0xff]
        %v300 = vld [vmem:[%s186 + $0x234] sm:$0xff]
        %v301 = vld [vmem:[%s186 + $0x23c] sm:$0xf]
        %v302 = vld [vmem:[%s186 + $0x240] sm:$0xff]
        %v303 = vld [vmem:[%s186 + $0x248] sm:$0xff]
        %v304 = vld [vmem:[%s186 + $0x250] sm:$0xff]
        %v305 = vld [vmem:[%s186 + $0x258] sm:$0xff]
        %v306 = vld [vmem:[%s186 + $0x260] sm:$0xf]
        %v307 = vld [vmem:[%s186 + $0x264] sm:$0xff]
        %v308 = vld [vmem:[%s186 + $0x26c] sm:$0xff]
        %v309 = vld [vmem:[%s186 + $0x274] sm:$0xff]
        %v310 = vld [vmem:[%s186 + $0x27c] sm:$0xff]
        %v311 = vld [vmem:[%s186 + $0x284] sm:$0xf]
        %v312 = vld [vmem:[%s186 + $0x288] sm:$0xff]
        %v313 = vld [vmem:[%s186 + $0x290] sm:$0xff]
        %v314 = vld [vmem:[%s186 + $0x298] sm:$0xff]
        %v315 = vld [vmem:[%s186 + $0x2a0] sm:$0xff]
        %v316 = vld [vmem:[%s186 + $0x2a8] sm:$0xf]
        %v317 = vld [vmem:[%s186 + $0x2ac] sm:$0xff]
        %v318 = vld [vmem:[%s186 + $0x2b4] sm:$0xff]
        %v319 = vld [vmem:[%s186 + $0x2bc] sm:$0xff]
        %v320 = vld [vmem:[%s186 + $0x2c4] sm:$0xff]
        %v321 = vld [vmem:[%s186 + $0x2cc] sm:$0xf]
        %v322 = vld [vmem:[%s186 + $0x2d0] sm:$0xff]
        %v323 = vld [vmem:[%s186 + $0x2d8] sm:$0xff]
        %v324 = vld [vmem:[%s186 + $0x2e0] sm:$0xff]
        %v325 = vld [vmem:[%s186 + $0x2e8] sm:$0xff]
        %v326 = vld [vmem:[%s186 + $0x2f0] sm:$0xf]
        %v327 = vld [vmem:[%s186 + $0x2f4] sm:$0xff]
        %v328 = vld [vmem:[%s186 + $0x2fc] sm:$0xff]
        %v329 = vld [vmem:[%s186 + $0x304] sm:$0xff]
        %v330 = vld [vmem:[%s186 + $0x30c] sm:$0xff]
        %v331 = vld [vmem:[%s186 + $0x314] sm:$0xf]
        %v332 = vld [vmem:[%s186 + $0x318] sm:$0xff]
        %v333 = vld [vmem:[%s186 + $0x320] sm:$0xff]
        %v334 = vld [vmem:[%s186 + $0x328] sm:$0xff]
        %v335 = vld [vmem:[%s186 + $0x330] sm:$0xff]
        %v336 = vld [vmem:[%s186 + $0x338] sm:$0xf]
        %v337 = vld [vmem:[%s186 + $0x33c] sm:$0xff]
        %v338 = vld [vmem:[%s186 + $0x344] sm:$0xff]
        %v339 = vld [vmem:[%s186 + $0x34c] sm:$0xff]
        %v340 = vld [vmem:[%s186 + $0x354] sm:$0xff]
        %v341 = vld [vmem:[%s186 + $0x35c] sm:$0xf]
        %v342 = vld [vmem:[%s186 + $0x360] sm:$0xff]
        %v343 = vld [vmem:[%s186 + $0x368] sm:$0xff]
        %v344 = vld [vmem:[%s186 + $0x370] sm:$0xff]
        %v345 = vld [vmem:[%s186 + $0x378] sm:$0xff]
        %v346 = vld [vmem:[%s186 + $0x380] sm:$0xf]
        %v347 = vld [vmem:[%s186 + $0x384] sm:$0xff]
        %v348 = vld [vmem:[%s186 + $0x38c] sm:$0xff]
        %v349 = vld [vmem:[%s186 + $0x394] sm:$0xff]
        %v350 = vld [vmem:[%s186 + $0x39c] sm:$0xff]
        %v351 = vld [vmem:[%s186 + $0x3a4] sm:$0xf]
        %v352 = vld [vmem:[%s186 + $0x3a8] sm:$0xff]
        %v353 = vld [vmem:[%s186 + $0x3b0] sm:$0xff]
        %v354 = vld [vmem:[%s186 + $0x3b8] sm:$0xff]
        %v355 = vld [vmem:[%s186 + $0x3c0] sm:$0xff]
        %v356 = vld [vmem:[%s186 + $0x3c8] sm:$0xf]
        %v357 = vld [vmem:[%s186 + $0x3cc] sm:$0xff]
        %v358 = vld [vmem:[%s186 + $0x3d4] sm:$0xff]
        %v359 = vld [vmem:[%s186 + $0x3dc] sm:$0xff]
        %v360 = vld [vmem:[%s186 + $0x3e4] sm:$0xff]
        %v361 = vld [vmem:[%s186 + $0x3ec] sm:$0xf]
        %v362 = vld [vmem:[%s186 + $0x3f0] sm:$0xff]
        %v363 = vld [vmem:[%s186 + $0x3f8] sm:$0xff]
        %v364 = vld [vmem:[%s186 + $0x400] sm:$0xff]
        %v365 = vld [vmem:[%s186 + $0x408] sm:$0xff]
        %v366 = vld [vmem:[%s186 + $0x410] sm:$0xf]
        %v367 = vld [vmem:[%s186 + $0x414] sm:$0xff]
        %v368 = vld [vmem:[%s186 + $0x41c] sm:$0xff]
        %v369 = vld [vmem:[%s186 + $0x424] sm:$0xff]
        %v370 = vld [vmem:[%s186 + $0x42c] sm:$0xff]
        %v371 = vld [vmem:[%s186 + $0x434] sm:$0xf]
        %v372 = vld [vmem:[%s186 + $0x438] sm:$0xff]
        %v373 = vld [vmem:[%s186 + $0x440] sm:$0xff]
        %v374 = vld [vmem:[%s186 + $0x448] sm:$0xff]
        %v375 = vld [vmem:[%s186 + $0x450] sm:$0xff]
        %v376 = vld [vmem:[%s186 + $0x458] sm:$0xf]
        %v377 = vld [vmem:[%s186 + $0x45c] sm:$0xff]
        %v378 = vld [vmem:[%s186 + $0x464] sm:$0xff]
        %v379 = vld [vmem:[%s186 + $0x46c] sm:$0xff]
        %v380 = vld [vmem:[%s186 + $0x474] sm:$0xff]
        %v381 = vld [vmem:[%s186 + $0x47c] sm:$0xf]
        %v382 = vld [vmem:[#allocation5] sm:$0xf]
        %v383 = vld [vmem:[#allocation5 + $0x4] sm:$0xf]
        %v384 = vld [vmem:[#allocation5 + $0x8] sm:$0xf]
        %v385 = vld [vmem:[#allocation5 + $0xc] sm:$0xf]
        %v386 = vld [vmem:[#allocation5 + $0x10] sm:$0xf]
        %v387 = vld [vmem:[#allocation5 + $0x14] sm:$0xf]
        %v388 = vld [vmem:[#allocation5 + $0x18] sm:$0xf]
        %v389 = vld [vmem:[#allocation5 + $0x1c] sm:$0xf]
        %v390 = vld [vmem:[#allocation5 + $0x20] sm:$0xf]
        %v391 = vld [vmem:[#allocation5 + $0x24] sm:$0xf]
        %v392 = vld [vmem:[#allocation5 + $0x28] sm:$0xf]
        %v393 = vld [vmem:[#allocation5 + $0x2c] sm:$0xf]
        %v394 = vld [vmem:[#allocation5 + $0x30] sm:$0xf]
        %v395 = vld [vmem:[#allocation5 + $0x34] sm:$0xf]
        %v396 = vld [vmem:[#allocation5 + $0x38] sm:$0xf]
        %v397 = vld [vmem:[#allocation5 + $0x3c] sm:$0xf]
        %v398 = vld [vmem:[#allocation5 + $0x40] sm:$0xf]
        %v399 = vld [vmem:[#allocation5 + $0x44] sm:$0xf]
        %v400 = vld [vmem:[#allocation5 + $0x48] sm:$0xf]
        %v401 = vld [vmem:[#allocation5 + $0x4c] sm:$0xf]
        %v402 = vld [vmem:[#allocation5 + $0x50] sm:$0xf]
        %v403 = vld [vmem:[#allocation5 + $0x54] sm:$0xf]
        %v404 = vld [vmem:[#allocation5 + $0x58] sm:$0xf]
        %v405 = vld [vmem:[#allocation5 + $0x5c] sm:$0xf]
        %v406 = vld [vmem:[#allocation5 + $0x60] sm:$0xf]
        %v407 = vld [vmem:[#allocation5 + $0x64] sm:$0xf]
        %v408 = vld [vmem:[#allocation5 + $0x68] sm:$0xf]
        %v409 = vld [vmem:[#allocation5 + $0x6c] sm:$0xf]
        %v410 = vld [vmem:[#allocation5 + $0x70] sm:$0xf]
        %v411 = vld [vmem:[#allocation5 + $0x74] sm:$0xf]
        %v412 = vld [vmem:[#allocation5 + $0x78] sm:$0xf]
        %v413 = vld [vmem:[#allocation5 + $0x7c] sm:$0xf]
        %v414 = vld [vmem:[#allocation5 + $0x80] sm:$0xf]
        %v415 = vld [vmem:[#allocation5 + $0x84] sm:$0xf]
        %v416 = vld [vmem:[#allocation5 + $0x88] sm:$0xf]
        %v417 = vld [vmem:[#allocation5 + $0x8c] sm:$0xf]
        %v418 = vld [vmem:[#allocation5 + $0x90] sm:$0xf]
        %v419 = vld [vmem:[#allocation5 + $0x94] sm:$0xf]
        %v420 = vld [vmem:[#allocation5 + $0x98] sm:$0xf]
        %v421 = vld [vmem:[#allocation5 + $0x9c] sm:$0xf]
        %v422 = vld [vmem:[#allocation5 + $0xa0] sm:$0xf]
        %v423 = vld [vmem:[#allocation5 + $0xa4] sm:$0xf]
        %v424 = vld [vmem:[#allocation5 + $0xa8] sm:$0xf]
        %v425 = vld [vmem:[#allocation5 + $0xac] sm:$0xf]
        %v426 = vld [vmem:[#allocation5 + $0xb0] sm:$0xf]
        %v427 = vld [vmem:[#allocation5 + $0xb4] sm:$0xf]
        %v428 = vld [vmem:[#allocation5 + $0xb8] sm:$0xf]
        %v429 = vld [vmem:[#allocation5 + $0xbc] sm:$0xf]
        %v430 = vld [vmem:[#allocation5 + $0xc0] sm:$0xf]
        %v431 = vld [vmem:[#allocation5 + $0xc4] sm:$0xf]
        %v432 = vld [vmem:[#allocation5 + $0xc8] sm:$0xf]
        %v433 = vld [vmem:[#allocation5 + $0xcc] sm:$0xf]
        %v434 = vld [vmem:[#allocation5 + $0xd0] sm:$0xf]
        %v435 = vld [vmem:[#allocation5 + $0xd4] sm:$0xf]
        %v436 = vld [vmem:[#allocation5 + $0xd8] sm:$0xf]
        %v437 = vld [vmem:[#allocation5 + $0xdc] sm:$0xf]
        %v438 = vld [vmem:[#allocation5 + $0xe0] sm:$0xf]
        %v439 = vld [vmem:[#allocation5 + $0xe4] sm:$0xf]
        %v440 = vld [vmem:[#allocation5 + $0xe8] sm:$0xf]
        %v441 = vld [vmem:[#allocation5 + $0xec] sm:$0xf]
        %v442 = vld [vmem:[#allocation5 + $0xf0] sm:$0xf]
        %v443 = vld [vmem:[#allocation5 + $0xf4] sm:$0xf]
        %v444 = vld [vmem:[#allocation5 + $0xf8] sm:$0xf]
        %v445 = vld [vmem:[#allocation5 + $0xfc] sm:$0xf]
        %v446 = vld [vmem:[#allocation5 + $0x100] sm:$0xf]
        %v447 = vld [vmem:[#allocation5 + $0x104] sm:$0xf]
        %v448 = vld [vmem:[#allocation5 + $0x108] sm:$0xf]
        %v449 = vld [vmem:[#allocation5 + $0x10c] sm:$0xf]
        %v450 = vld [vmem:[#allocation5 + $0x110] sm:$0xf]
        %v451 = vld [vmem:[#allocation5 + $0x114] sm:$0xf]
        %v452 = vld [vmem:[#allocation5 + $0x118] sm:$0xf]
        %v453 = vld [vmem:[#allocation5 + $0x11c] sm:$0xf]
        %v454 = vld [vmem:[#allocation5 + $0x120] sm:$0xf]
        %v455 = vld [vmem:[#allocation5 + $0x124] sm:$0xf]
        %v456 = vld [vmem:[#allocation5 + $0x128] sm:$0xf]
        %v457 = vld [vmem:[#allocation5 + $0x12c] sm:$0xf]
        %v458 = vld [vmem:[#allocation5 + $0x130] sm:$0xf]
        %v459 = vld [vmem:[#allocation5 + $0x134] sm:$0xf]
        %v460 = vld [vmem:[#allocation5 + $0x138] sm:$0xf]
        %v461 = vld [vmem:[#allocation5 + $0x13c] sm:$0xf]
        %v462 = vld [vmem:[#allocation5 + $0x140] sm:$0xf]
        %v463 = vld [vmem:[#allocation5 + $0x144] sm:$0xf]
        %v464 = vld [vmem:[#allocation5 + $0x148] sm:$0xf]
        %v465 = vld [vmem:[#allocation5 + $0x14c] sm:$0xf]
        %v466 = vld [vmem:[#allocation5 + $0x150] sm:$0xf]
        %v467 = vld [vmem:[#allocation5 + $0x154] sm:$0xf]
        %v468 = vld [vmem:[#allocation5 + $0x158] sm:$0xf]
        %v469 = vld [vmem:[#allocation5 + $0x15c] sm:$0xf]
        %v470 = vld [vmem:[#allocation5 + $0x160] sm:$0xf]
        %v471 = vld [vmem:[#allocation5 + $0x164] sm:$0xf]
        %v472 = vld [vmem:[#allocation5 + $0x168] sm:$0xf]
        %v473 = vld [vmem:[#allocation5 + $0x16c] sm:$0xf]
        %v474 = vld [vmem:[#allocation5 + $0x170] sm:$0xf]
        %v475 = vld [vmem:[#allocation5 + $0x174] sm:$0xf]
        %v476 = vld [vmem:[#allocation5 + $0x178] sm:$0xf]
        %v477 = vld [vmem:[#allocation5 + $0x17c] sm:$0xf]
        %v478 = vld [vmem:[#allocation5 + $0x180] sm:$0xf]
        %v479 = vld [vmem:[#allocation5 + $0x184] sm:$0xf]
        %v480 = vld [vmem:[#allocation5 + $0x188] sm:$0xf]
        %v481 = vld [vmem:[#allocation5 + $0x18c] sm:$0xf]
        %v482 = vld [vmem:[#allocation5 + $0x190] sm:$0xf]
        %v483 = vld [vmem:[#allocation5 + $0x194] sm:$0xf]
        %v484 = vld [vmem:[#allocation5 + $0x198] sm:$0xf]
        %v485 = vld [vmem:[#allocation5 + $0x19c] sm:$0xf]
        %v486 = vld [vmem:[#allocation5 + $0x1a0] sm:$0xf]
        %v487 = vld [vmem:[#allocation5 + $0x1a4] sm:$0xf]
        %v488 = vld [vmem:[#allocation5 + $0x1a8] sm:$0xf]
        %v489 = vld [vmem:[#allocation5 + $0x1ac] sm:$0xf]
        %v490 = vld [vmem:[#allocation5 + $0x1b0] sm:$0xf]
        %v491 = vld [vmem:[#allocation5 + $0x1b4] sm:$0xf]
        %v492 = vld [vmem:[#allocation5 + $0x1b8] sm:$0xf]
        %v493 = vld [vmem:[#allocation5 + $0x1bc] sm:$0xf]
        %v494 = vld [vmem:[#allocation5 + $0x1c0] sm:$0xf]
        %v495 = vld [vmem:[#allocation5 + $0x1c4] sm:$0xf]
        %v496 = vld [vmem:[#allocation5 + $0x1c8] sm:$0xf]
        %v497 = vld [vmem:[#allocation5 + $0x1cc] sm:$0xf]
        %v498 = vld [vmem:[#allocation5 + $0x1d0] sm:$0xf]
        %v499 = vld [vmem:[#allocation5 + $0x1d4] sm:$0xf]
        %v500 = vld [vmem:[#allocation5 + $0x1d8] sm:$0xf]
        %v501 = vld [vmem:[#allocation5 + $0x1dc] sm:$0xf]
        %v502 = vld [vmem:[#allocation5 + $0x1e0] sm:$0xf]
        %v503 = vld [vmem:[#allocation5 + $0x1e4] sm:$0xf]
        %v504 = vld [vmem:[#allocation5 + $0x1e8] sm:$0xf]
        %v505 = vld [vmem:[#allocation5 + $0x1ec] sm:$0xf]
        %v506 = vld [vmem:[#allocation5 + $0x1f0] sm:$0xf]
        %v507 = vld [vmem:[#allocation5 + $0x1f4] sm:$0xf]
        %v508 = vld [vmem:[#allocation5 + $0x1f8] sm:$0xf]
        %v509 = vld [vmem:[#allocation5 + $0x1fc] sm:$0xf]
        %v510 = vld [vmem:[#allocation5 + $0x200] sm:$0xf]
        %v511 = vld [vmem:[#allocation5 + $0x204] sm:$0xf]
        %v512 = vld [vmem:[#allocation5 + $0x208] sm:$0xf]
        %v513 = vld [vmem:[#allocation5 + $0x20c] sm:$0xf]
        %v514 = vld [vmem:[#allocation5 + $0x210] sm:$0xf]
        %v515 = vld [vmem:[#allocation5 + $0x214] sm:$0xf]
        %v516 = vld [vmem:[#allocation5 + $0x218] sm:$0xf]
        %v517 = vld [vmem:[#allocation5 + $0x21c] sm:$0xf]
        %v518 = vld [vmem:[#allocation5 + $0x220] sm:$0xf]
        %v519 = vld [vmem:[#allocation5 + $0x224] sm:$0xf]
        %v520 = vld [vmem:[#allocation5 + $0x228] sm:$0xf]
        %v521 = vld [vmem:[#allocation5 + $0x22c] sm:$0xf]
        %v522 = vld [vmem:[#allocation5 + $0x230] sm:$0xf]
        %v523 = vld [vmem:[#allocation5 + $0x234] sm:$0xf]
        %v524 = vld [vmem:[#allocation5 + $0x238] sm:$0xf]
        %v525 = vld [vmem:[#allocation5 + $0x23c] sm:$0xf]
        %v686 = vunpack.c.l.b16 %v222
        %v687 = vunpack.c.h.b16 %v222
        %v688 = vunpack.c.l.b16 %v223
        %v689 = vunpack.c.h.b16 %v223
        %v690 = vunpack.c.l.b16 %v224
        %v691 = vunpack.c.h.b16 %v224
        %v692 = vunpack.c.l.b16 %v225
        %v693 = vunpack.c.h.b16 %v225
        %v694 = vunpack.c.l.b16 %v226
        %v695 = vunpack.c.l.b16 %v227
        %v696 = vunpack.c.h.b16 %v227
        %v697 = vunpack.c.l.b16 %v228
        %v698 = vunpack.c.h.b16 %v228
        %v699 = vunpack.c.l.b16 %v229
        %v700 = vunpack.c.h.b16 %v229
        %v701 = vunpack.c.l.b16 %v230
        %v702 = vunpack.c.h.b16 %v230
        %v703 = vunpack.c.l.b16 %v231
        %v704 = vunpack.c.l.b16 %v232
        %v705 = vunpack.c.h.b16 %v232
        %v706 = vunpack.c.l.b16 %v233
        %v707 = vunpack.c.h.b16 %v233
        %v708 = vunpack.c.l.b16 %v234
        %v709 = vunpack.c.h.b16 %v234
        %v710 = vunpack.c.l.b16 %v235
        %v711 = vunpack.c.h.b16 %v235
        %v712 = vunpack.c.l.b16 %v236
        %v713 = vunpack.c.l.b16 %v237
        %v714 = vunpack.c.h.b16 %v237
        %v715 = vunpack.c.l.b16 %v238
        %v716 = vunpack.c.h.b16 %v238
        %v717 = vunpack.c.l.b16 %v239
        %v718 = vunpack.c.h.b16 %v239
        %v719 = vunpack.c.l.b16 %v240
        %v720 = vunpack.c.h.b16 %v240
        %v721 = vunpack.c.l.b16 %v241
        %v722 = vunpack.c.l.b16 %v242
        %v723 = vunpack.c.h.b16 %v242
        %v724 = vunpack.c.l.b16 %v243
        %v725 = vunpack.c.h.b16 %v243
        %v726 = vunpack.c.l.b16 %v244
        %v727 = vunpack.c.h.b16 %v244
        %v728 = vunpack.c.l.b16 %v245
        %v729 = vunpack.c.h.b16 %v245
        %v730 = vunpack.c.l.b16 %v246
        %v731 = vunpack.c.l.b16 %v247
        %v732 = vunpack.c.h.b16 %v247
        %v733 = vunpack.c.l.b16 %v248
        %v734 = vunpack.c.h.b16 %v248
        %v735 = vunpack.c.l.b16 %v249
        %v736 = vunpack.c.h.b16 %v249
        %v737 = vunpack.c.l.b16 %v250
        %v738 = vunpack.c.h.b16 %v250
        %v739 = vunpack.c.l.b16 %v251
        %v740 = vunpack.c.l.b16 %v252
        %v741 = vunpack.c.h.b16 %v252
        %v742 = vunpack.c.l.b16 %v253
        %v743 = vunpack.c.h.b16 %v253
        %v744 = vunpack.c.l.b16 %v254
        %v745 = vunpack.c.h.b16 %v254
        %v746 = vunpack.c.l.b16 %v255
        %v747 = vunpack.c.h.b16 %v255
        %v748 = vunpack.c.l.b16 %v256
        %v749 = vunpack.c.l.b16 %v257
        %v750 = vunpack.c.h.b16 %v257
        %v751 = vunpack.c.l.b16 %v258
        %v752 = vunpack.c.h.b16 %v258
        %v753 = vunpack.c.l.b16 %v259
        %v754 = vunpack.c.h.b16 %v259
        %v755 = vunpack.c.l.b16 %v260
        %v756 = vunpack.c.h.b16 %v260
        %v757 = vunpack.c.l.b16 %v261
        %v758 = vunpack.c.l.b16 %v262
        %v759 = vunpack.c.h.b16 %v262
        %v760 = vunpack.c.l.b16 %v263
        %v761 = vunpack.c.h.b16 %v263
        %v762 = vunpack.c.l.b16 %v264
        %v763 = vunpack.c.h.b16 %v264
        %v764 = vunpack.c.l.b16 %v265
        %v765 = vunpack.c.h.b16 %v265
        %v766 = vunpack.c.l.b16 %v266
        %v767 = vunpack.c.l.b16 %v267
        %v768 = vunpack.c.h.b16 %v267
        %v769 = vunpack.c.l.b16 %v268
        %v770 = vunpack.c.h.b16 %v268
        %v771 = vunpack.c.l.b16 %v269
        %v772 = vunpack.c.h.b16 %v269
        %v773 = vunpack.c.l.b16 %v270
        %v774 = vunpack.c.h.b16 %v270
        %v775 = vunpack.c.l.b16 %v271
        %v776 = vunpack.c.l.b16 %v272
        %v777 = vunpack.c.h.b16 %v272
        %v778 = vunpack.c.l.b16 %v273
        %v779 = vunpack.c.h.b16 %v273
        %v780 = vunpack.c.l.b16 %v274
        %v781 = vunpack.c.h.b16 %v274
        %v782 = vunpack.c.l.b16 %v275
        %v783 = vunpack.c.h.b16 %v275
        %v784 = vunpack.c.l.b16 %v276
        %v785 = vunpack.c.l.b16 %v277
        %v786 = vunpack.c.h.b16 %v277
        %v787 = vunpack.c.l.b16 %v278
        %v788 = vunpack.c.h.b16 %v278
        %v789 = vunpack.c.l.b16 %v279
        %v790 = vunpack.c.h.b16 %v279
        %v791 = vunpack.c.l.b16 %v280
        %v792 = vunpack.c.h.b16 %v280
        %v793 = vunpack.c.l.b16 %v281
        %v794 = vunpack.c.l.b16 %v282
        %v795 = vunpack.c.h.b16 %v282
        %v796 = vunpack.c.l.b16 %v283
        %v797 = vunpack.c.h.b16 %v283
        %v798 = vunpack.c.l.b16 %v284
        %v799 = vunpack.c.h.b16 %v284
        %v800 = vunpack.c.l.b16 %v285
        %v801 = vunpack.c.h.b16 %v285
        %v802 = vunpack.c.l.b16 %v286
        %v803 = vunpack.c.l.b16 %v287
        %v804 = vunpack.c.h.b16 %v287
        %v805 = vunpack.c.l.b16 %v288
        %v806 = vunpack.c.h.b16 %v288
        %v807 = vunpack.c.l.b16 %v289
        %v808 = vunpack.c.h.b16 %v289
        %v809 = vunpack.c.l.b16 %v290
        %v810 = vunpack.c.h.b16 %v290
        %v811 = vunpack.c.l.b16 %v291
        %v812 = vunpack.c.l.b16 %v292
        %v813 = vunpack.c.h.b16 %v292
        %v814 = vunpack.c.l.b16 %v293
        %v815 = vunpack.c.h.b16 %v293
        %v816 = vunpack.c.l.b16 %v294
        %v817 = vunpack.c.h.b16 %v294
        %v818 = vunpack.c.l.b16 %v295
        %v819 = vunpack.c.h.b16 %v295
        %v820 = vunpack.c.l.b16 %v296
        %v821 = vunpack.c.l.b16 %v297
        %v822 = vunpack.c.h.b16 %v297
        %v823 = vunpack.c.l.b16 %v298
        %v824 = vunpack.c.h.b16 %v298
        %v825 = vunpack.c.l.b16 %v299
        %v826 = vunpack.c.h.b16 %v299
        %v827 = vunpack.c.l.b16 %v300
        %v828 = vunpack.c.h.b16 %v300
        %v829 = vunpack.c.l.b16 %v301
        %v830 = vunpack.c.l.b16 %v302
        %v831 = vunpack.c.h.b16 %v302
        %v832 = vunpack.c.l.b16 %v303
        %v833 = vunpack.c.h.b16 %v303
        %v834 = vunpack.c.l.b16 %v304
        %v835 = vunpack.c.h.b16 %v304
        %v836 = vunpack.c.l.b16 %v305
        %v837 = vunpack.c.h.b16 %v305
        %v838 = vunpack.c.l.b16 %v306
        %v839 = vunpack.c.l.b16 %v307
        %v840 = vunpack.c.h.b16 %v307
        %v841 = vunpack.c.l.b16 %v308
        %v842 = vunpack.c.h.b16 %v308
        %v843 = vunpack.c.l.b16 %v309
        %v844 = vunpack.c.h.b16 %v309
        %v845 = vunpack.c.l.b16 %v310
        %v846 = vunpack.c.h.b16 %v310
        %v847 = vunpack.c.l.b16 %v311
        %v848 = vunpack.c.l.b16 %v312
        %v849 = vunpack.c.h.b16 %v312
        %v850 = vunpack.c.l.b16 %v313
        %v851 = vunpack.c.h.b16 %v313
        %v852 = vunpack.c.l.b16 %v314
        %v853 = vunpack.c.h.b16 %v314
        %v854 = vunpack.c.l.b16 %v315
        %v855 = vunpack.c.h.b16 %v315
        %v856 = vunpack.c.l.b16 %v316
        %v857 = vunpack.c.l.b16 %v317
        %v858 = vunpack.c.h.b16 %v317
        %v859 = vunpack.c.l.b16 %v318
        %v860 = vunpack.c.h.b16 %v318
        %v861 = vunpack.c.l.b16 %v319
        %v862 = vunpack.c.h.b16 %v319
        %v863 = vunpack.c.l.b16 %v320
        %v864 = vunpack.c.h.b16 %v320
        %v865 = vunpack.c.l.b16 %v321
        %v866 = vunpack.c.l.b16 %v322
        %v867 = vunpack.c.h.b16 %v322
        %v868 = vunpack.c.l.b16 %v323
        %v869 = vunpack.c.h.b16 %v323
        %v870 = vunpack.c.l.b16 %v324
        %v871 = vunpack.c.h.b16 %v324
        %v872 = vunpack.c.l.b16 %v325
        %v873 = vunpack.c.h.b16 %v325
        %v874 = vunpack.c.l.b16 %v326
        %v875 = vunpack.c.l.b16 %v327
        %v876 = vunpack.c.h.b16 %v327
        %v877 = vunpack.c.l.b16 %v328
        %v878 = vunpack.c.h.b16 %v328
        %v879 = vunpack.c.l.b16 %v329
        %v880 = vunpack.c.h.b16 %v329
        %v881 = vunpack.c.l.b16 %v330
        %v882 = vunpack.c.h.b16 %v330
        %v883 = vunpack.c.l.b16 %v331
        %v884 = vunpack.c.l.b16 %v332
        %v885 = vunpack.c.h.b16 %v332
        %v886 = vunpack.c.l.b16 %v333
        %v887 = vunpack.c.h.b16 %v333
        %v888 = vunpack.c.l.b16 %v334
        %v889 = vunpack.c.h.b16 %v334
        %v890 = vunpack.c.l.b16 %v335
        %v891 = vunpack.c.h.b16 %v335
        %v892 = vunpack.c.l.b16 %v336
        %v893 = vunpack.c.l.b16 %v337
        %v894 = vunpack.c.h.b16 %v337
        %v895 = vunpack.c.l.b16 %v338
        %v896 = vunpack.c.h.b16 %v338
        %v897 = vunpack.c.l.b16 %v339
        %v898 = vunpack.c.h.b16 %v339
        %v899 = vunpack.c.l.b16 %v340
        %v900 = vunpack.c.h.b16 %v340
        %v901 = vunpack.c.l.b16 %v341
        %v902 = vunpack.c.l.b16 %v342
        %v903 = vunpack.c.h.b16 %v342
        %v904 = vunpack.c.l.b16 %v343
        %v905 = vunpack.c.h.b16 %v343
        %v906 = vunpack.c.l.b16 %v344
        %v907 = vunpack.c.h.b16 %v344
        %v908 = vunpack.c.l.b16 %v345
        %v909 = vunpack.c.h.b16 %v345
        %v910 = vunpack.c.l.b16 %v346
        %v911 = vunpack.c.l.b16 %v347
        %v912 = vunpack.c.h.b16 %v347
        %v913 = vunpack.c.l.b16 %v348
        %v914 = vunpack.c.h.b16 %v348
        %v915 = vunpack.c.l.b16 %v349
        %v916 = vunpack.c.h.b16 %v349
        %v917 = vunpack.c.l.b16 %v350
        %v918 = vunpack.c.h.b16 %v350
        %v919 = vunpack.c.l.b16 %v351
        %v920 = vunpack.c.l.b16 %v352
        %v921 = vunpack.c.h.b16 %v352
        %v922 = vunpack.c.l.b16 %v353
        %v923 = vunpack.c.h.b16 %v353
        %v924 = vunpack.c.l.b16 %v354
        %v925 = vunpack.c.h.b16 %v354
        %v926 = vunpack.c.l.b16 %v355
        %v927 = vunpack.c.h.b16 %v355
        %v928 = vunpack.c.l.b16 %v356
        %v929 = vunpack.c.l.b16 %v357
        %v930 = vunpack.c.h.b16 %v357
        %v931 = vunpack.c.l.b16 %v358
        %v932 = vunpack.c.h.b16 %v358
        %v933 = vunpack.c.l.b16 %v359
        %v934 = vunpack.c.h.b16 %v359
        %v935 = vunpack.c.l.b16 %v360
        %v936 = vunpack.c.h.b16 %v360
        %v937 = vunpack.c.l.b16 %v361
        %v938 = vunpack.c.l.b16 %v362
        %v939 = vunpack.c.h.b16 %v362
        %v940 = vunpack.c.l.b16 %v363
        %v941 = vunpack.c.h.b16 %v363
        %v942 = vunpack.c.l.b16 %v364
        %v943 = vunpack.c.h.b16 %v364
        %v944 = vunpack.c.l.b16 %v365
        %v945 = vunpack.c.h.b16 %v365
        %v946 = vunpack.c.l.b16 %v366
        %v947 = vunpack.c.l.b16 %v367
        %v948 = vunpack.c.h.b16 %v367
        %v949 = vunpack.c.l.b16 %v368
        %v950 = vunpack.c.h.b16 %v368
        %v951 = vunpack.c.l.b16 %v369
        %v952 = vunpack.c.h.b16 %v369
        %v953 = vunpack.c.l.b16 %v370
        %v954 = vunpack.c.h.b16 %v370
        %v955 = vunpack.c.l.b16 %v371
        %v956 = vunpack.c.l.b16 %v372
        %v957 = vunpack.c.h.b16 %v372
        %v958 = vunpack.c.l.b16 %v373
        %v959 = vunpack.c.h.b16 %v373
        %v960 = vunpack.c.l.b16 %v374
        %v961 = vunpack.c.h.b16 %v374
        %v962 = vunpack.c.l.b16 %v375
        %v963 = vunpack.c.h.b16 %v375
        %v964 = vunpack.c.l.b16 %v376
        %v965 = vunpack.c.l.b16 %v377
        %v966 = vunpack.c.h.b16 %v377
        %v967 = vunpack.c.l.b16 %v378
        %v968 = vunpack.c.h.b16 %v378
        %v969 = vunpack.c.l.b16 %v379
        %v970 = vunpack.c.h.b16 %v379
        %v971 = vunpack.c.l.b16 %v380
        %v972 = vunpack.c.h.b16 %v380
        %v973 = vunpack.c.l.b16 %v381
        %v974 = vpack.c.b16 %v695, %v686
        %v975 = vpack.c.b16 %v696, %v687
        %v976 = vpack.c.b16 %v697, %v688
        %v977 = vpack.c.b16 %v698, %v689
        %v978 = vpack.c.b16 %v699, %v690
        %v979 = vpack.c.b16 %v700, %v691
        %v980 = vpack.c.b16 %v701, %v692
        %v981 = vpack.c.b16 %v702, %v693
        %v982 = vpack.c.b16 %v703, %v694
        %v983 = vpack.c.b16 %v713, %v704
        %v984 = vpack.c.b16 %v714, %v705
        %v985 = vpack.c.b16 %v715, %v706
        %v986 = vpack.c.b16 %v716, %v707
        %v987 = vpack.c.b16 %v717, %v708
        %v988 = vpack.c.b16 %v718, %v709
        %v989 = vpack.c.b16 %v719, %v710
        %v990 = vpack.c.b16 %v720, %v711
        %v991 = vpack.c.b16 %v721, %v712
        %v992 = vpack.c.b16 %v731, %v722
        %v993 = vpack.c.b16 %v732, %v723
        %v994 = vpack.c.b16 %v733, %v724
        %v995 = vpack.c.b16 %v734, %v725
        %v996 = vpack.c.b16 %v735, %v726
        %v997 = vpack.c.b16 %v736, %v727
        %v998 = vpack.c.b16 %v737, %v728
        %v999 = vpack.c.b16 %v738, %v729
        %v1000 = vpack.c.b16 %v739, %v730
        %v1001 = vpack.c.b16 %v749, %v740
        %v1002 = vpack.c.b16 %v750, %v741
        %v1003 = vpack.c.b16 %v751, %v742
        %v1004 = vpack.c.b16 %v752, %v743
        %v1005 = vpack.c.b16 %v753, %v744
        %v1006 = vpack.c.b16 %v754, %v745
        %v1007 = vpack.c.b16 %v755, %v746
        %v1008 = vpack.c.b16 %v756, %v747
        %v1009 = vpack.c.b16 %v757, %v748
        %v1010 = vpack.c.b16 %v767, %v758
        %v1011 = vpack.c.b16 %v768, %v759
        %v1012 = vpack.c.b16 %v769, %v760
        %v1013 = vpack.c.b16 %v770, %v761
        %v1014 = vpack.c.b16 %v771, %v762
        %v1015 = vpack.c.b16 %v772, %v763
        %v1016 = vpack.c.b16 %v773, %v764
        %v1017 = vpack.c.b16 %v774, %v765
        %v1018 = vpack.c.b16 %v775, %v766
        %v1019 = vpack.c.b16 %v785, %v776
        %v1020 = vpack.c.b16 %v786, %v777
        %v1021 = vpack.c.b16 %v787, %v778
        %v1022 = vpack.c.b16 %v788, %v779
        %v1023 = vpack.c.b16 %v789, %v780
        %v1024 = vpack.c.b16 %v790, %v781
        %v1025 = vpack.c.b16 %v791, %v782
        %v1026 = vpack.c.b16 %v792, %v783
        %v1027 = vpack.c.b16 %v793, %v784
        %v1028 = vpack.c.b16 %v803, %v794
        %v1029 = vpack.c.b16 %v804, %v795
        %v1030 = vpack.c.b16 %v805, %v796
        %v1031 = vpack.c.b16 %v806, %v797
        %v1032 = vpack.c.b16 %v807, %v798
        %v1033 = vpack.c.b16 %v808, %v799
        %v1034 = vpack.c.b16 %v809, %v800
        %v1035 = vpack.c.b16 %v810, %v801
        %v1036 = vpack.c.b16 %v811, %v802
        %v1037 = vpack.c.b16 %v821, %v812
        %v1038 = vpack.c.b16 %v822, %v813
        %v1039 = vpack.c.b16 %v823, %v814
        %v1040 = vpack.c.b16 %v824, %v815
        %v1041 = vpack.c.b16 %v825, %v816
        %v1042 = vpack.c.b16 %v826, %v817
        %v1043 = vpack.c.b16 %v827, %v818
        %v1044 = vpack.c.b16 %v828, %v819
        %v1045 = vpack.c.b16 %v829, %v820
        %v1046 = vpack.c.b16 %v839, %v830
        %v1047 = vpack.c.b16 %v840, %v831
        %v1048 = vpack.c.b16 %v841, %v832
        %v1049 = vpack.c.b16 %v842, %v833
        %v1050 = vpack.c.b16 %v843, %v834
        %v1051 = vpack.c.b16 %v844, %v835
        %v1052 = vpack.c.b16 %v845, %v836
        %v1053 = vpack.c.b16 %v846, %v837
        %v1054 = vpack.c.b16 %v847, %v838
        %v1055 = vpack.c.b16 %v857, %v848
        %v1056 = vpack.c.b16 %v858, %v849
        %v1057 = vpack.c.b16 %v859, %v850
        %v1058 = vpack.c.b16 %v860, %v851
        %v1059 = vpack.c.b16 %v861, %v852
        %v1060 = vpack.c.b16 %v862, %v853
        %v1061 = vpack.c.b16 %v863, %v854
        %v1062 = vpack.c.b16 %v864, %v855
        %v1063 = vpack.c.b16 %v865, %v856
        %v1064 = vpack.c.b16 %v875, %v866
        %v1065 = vpack.c.b16 %v876, %v867
        %v1066 = vpack.c.b16 %v877, %v868
        %v1067 = vpack.c.b16 %v878, %v869
        %v1068 = vpack.c.b16 %v879, %v870
        %v1069 = vpack.c.b16 %v880, %v871
        %v1070 = vpack.c.b16 %v881, %v872
        %v1071 = vpack.c.b16 %v882, %v873
        %v1072 = vpack.c.b16 %v883, %v874
        %v1073 = vpack.c.b16 %v893, %v884
        %v1074 = vpack.c.b16 %v894, %v885
        %v1075 = vpack.c.b16 %v895, %v886
        %v1076 = vpack.c.b16 %v896, %v887
        %v1077 = vpack.c.b16 %v897, %v888
        %v1078 = vpack.c.b16 %v898, %v889
        %v1079 = vpack.c.b16 %v899, %v890
        %v1080 = vpack.c.b16 %v900, %v891
        %v1081 = vpack.c.b16 %v901, %v892
        %v1082 = vpack.c.b16 %v911, %v902
        %v1083 = vpack.c.b16 %v912, %v903
        %v1084 = vpack.c.b16 %v913, %v904
        %v1085 = vpack.c.b16 %v914, %v905
        %v1086 = vpack.c.b16 %v915, %v906
        %v1087 = vpack.c.b16 %v916, %v907
        %v1088 = vpack.c.b16 %v917, %v908
        %v1089 = vpack.c.b16 %v918, %v909
        %v1090 = vpack.c.b16 %v919, %v910
        %v1091 = vpack.c.b16 %v929, %v920
        %v1092 = vpack.c.b16 %v930, %v921
        %v1093 = vpack.c.b16 %v931, %v922
        %v1094 = vpack.c.b16 %v932, %v923
        %v1095 = vpack.c.b16 %v933, %v924
        %v1096 = vpack.c.b16 %v934, %v925
        %v1097 = vpack.c.b16 %v935, %v926
        %v1098 = vpack.c.b16 %v936, %v927
        %v1099 = vpack.c.b16 %v937, %v928
        %v1100 = vpack.c.b16 %v947, %v938
        %v1101 = vpack.c.b16 %v948, %v939
        %v1102 = vpack.c.b16 %v949, %v940
        %v1103 = vpack.c.b16 %v950, %v941
        %v1104 = vpack.c.b16 %v951, %v942
        %v1105 = vpack.c.b16 %v952, %v943
        %v1106 = vpack.c.b16 %v953, %v944
        %v1107 = vpack.c.b16 %v954, %v945
        %v1108 = vpack.c.b16 %v955, %v946
        %v1109 = vpack.c.b16 %v965, %v956
        %v1110 = vpack.c.b16 %v966, %v957
        %v1111 = vpack.c.b16 %v967, %v958
        %v1112 = vpack.c.b16 %v968, %v959
        %v1113 = vpack.c.b16 %v969, %v960
        %v1114 = vpack.c.b16 %v970, %v961
        %v1115 = vpack.c.b16 %v971, %v962
        %v1116 = vpack.c.b16 %v972, %v963
        %v1117 = vpack.c.b16 %v973, %v964
        %v1406 = vunpack.c.l.b16 %v382
        %v1407 = vunpack.c.l.b16 %v383
        %v1408 = vunpack.c.l.b16 %v384
        %v1409 = vunpack.c.l.b16 %v385
        %v1410 = vunpack.c.l.b16 %v386
        %v1411 = vunpack.c.l.b16 %v387
        %v1412 = vunpack.c.l.b16 %v388
        %v1413 = vunpack.c.l.b16 %v389
        %v1414 = vunpack.c.l.b16 %v390
        %v1415 = vunpack.c.l.b16 %v391
        %v1416 = vunpack.c.l.b16 %v392
        %v1417 = vunpack.c.l.b16 %v393
        %v1418 = vunpack.c.l.b16 %v394
        %v1419 = vunpack.c.l.b16 %v395
        %v1420 = vunpack.c.l.b16 %v396
        %v1421 = vunpack.c.l.b16 %v397
        %v1422 = vunpack.c.l.b16 %v398
        %v1423 = vunpack.c.l.b16 %v399
        %v1424 = vunpack.c.l.b16 %v400
        %v1425 = vunpack.c.l.b16 %v401
        %v1426 = vunpack.c.l.b16 %v402
        %v1427 = vunpack.c.l.b16 %v403
        %v1428 = vunpack.c.l.b16 %v404
        %v1429 = vunpack.c.l.b16 %v405
        %v1430 = vunpack.c.l.b16 %v406
        %v1431 = vunpack.c.l.b16 %v407
        %v1432 = vunpack.c.l.b16 %v408
        %v1433 = vunpack.c.l.b16 %v409
        %v1434 = vunpack.c.l.b16 %v410
        %v1435 = vunpack.c.l.b16 %v411
        %v1436 = vunpack.c.l.b16 %v412
        %v1437 = vunpack.c.l.b16 %v413
        %v1438 = vunpack.c.l.b16 %v414
        %v1439 = vunpack.c.l.b16 %v415
        %v1440 = vunpack.c.l.b16 %v416
        %v1441 = vunpack.c.l.b16 %v417
        %v1442 = vunpack.c.l.b16 %v418
        %v1443 = vunpack.c.l.b16 %v419
        %v1444 = vunpack.c.l.b16 %v420
        %v1445 = vunpack.c.l.b16 %v421
        %v1446 = vunpack.c.l.b16 %v422
        %v1447 = vunpack.c.l.b16 %v423
        %v1448 = vunpack.c.l.b16 %v424
        %v1449 = vunpack.c.l.b16 %v425
        %v1450 = vunpack.c.l.b16 %v426
        %v1451 = vunpack.c.l.b16 %v427
        %v1452 = vunpack.c.l.b16 %v428
        %v1453 = vunpack.c.l.b16 %v429
        %v1454 = vunpack.c.l.b16 %v430
        %v1455 = vunpack.c.l.b16 %v431
        %v1456 = vunpack.c.l.b16 %v432
        %v1457 = vunpack.c.l.b16 %v433
        %v1458 = vunpack.c.l.b16 %v434
        %v1459 = vunpack.c.l.b16 %v435
        %v1460 = vunpack.c.l.b16 %v436
        %v1461 = vunpack.c.l.b16 %v437
        %v1462 = vunpack.c.l.b16 %v438
        %v1463 = vunpack.c.l.b16 %v439
        %v1464 = vunpack.c.l.b16 %v440
        %v1465 = vunpack.c.l.b16 %v441
        %v1466 = vunpack.c.l.b16 %v442
        %v1467 = vunpack.c.l.b16 %v443
        %v1468 = vunpack.c.l.b16 %v444
        %v1469 = vunpack.c.l.b16 %v445
        %v1470 = vunpack.c.l.b16 %v446
        %v1471 = vunpack.c.l.b16 %v447
        %v1472 = vunpack.c.l.b16 %v448
        %v1473 = vunpack.c.l.b16 %v449
        %v1474 = vunpack.c.l.b16 %v450
        %v1475 = vunpack.c.l.b16 %v451
        %v1476 = vunpack.c.l.b16 %v452
        %v1477 = vunpack.c.l.b16 %v453
        %v1478 = vunpack.c.l.b16 %v454
        %v1479 = vunpack.c.l.b16 %v455
        %v1480 = vunpack.c.l.b16 %v456
        %v1481 = vunpack.c.l.b16 %v457
        %v1482 = vunpack.c.l.b16 %v458
        %v1483 = vunpack.c.l.b16 %v459
        %v1484 = vunpack.c.l.b16 %v460
        %v1485 = vunpack.c.l.b16 %v461
        %v1486 = vunpack.c.l.b16 %v462
        %v1487 = vunpack.c.l.b16 %v463
        %v1488 = vunpack.c.l.b16 %v464
        %v1489 = vunpack.c.l.b16 %v465
        %v1490 = vunpack.c.l.b16 %v466
        %v1491 = vunpack.c.l.b16 %v467
        %v1492 = vunpack.c.l.b16 %v468
        %v1493 = vunpack.c.l.b16 %v469
        %v1494 = vunpack.c.l.b16 %v470
        %v1495 = vunpack.c.l.b16 %v471
        %v1496 = vunpack.c.l.b16 %v472
        %v1497 = vunpack.c.l.b16 %v473
        %v1498 = vunpack.c.l.b16 %v474
        %v1499 = vunpack.c.l.b16 %v475
        %v1500 = vunpack.c.l.b16 %v476
        %v1501 = vunpack.c.l.b16 %v477
        %v1502 = vunpack.c.l.b16 %v478
        %v1503 = vunpack.c.l.b16 %v479
        %v1504 = vunpack.c.l.b16 %v480
        %v1505 = vunpack.c.l.b16 %v481
        %v1506 = vunpack.c.l.b16 %v482
        %v1507 = vunpack.c.l.b16 %v483
        %v1508 = vunpack.c.l.b16 %v484
        %v1509 = vunpack.c.l.b16 %v485
        %v1510 = vunpack.c.l.b16 %v486
        %v1511 = vunpack.c.l.b16 %v487
        %v1512 = vunpack.c.l.b16 %v488
        %v1513 = vunpack.c.l.b16 %v489
        %v1514 = vunpack.c.l.b16 %v490
        %v1515 = vunpack.c.l.b16 %v491
        %v1516 = vunpack.c.l.b16 %v492
        %v1517 = vunpack.c.l.b16 %v493
        %v1518 = vunpack.c.l.b16 %v494
        %v1519 = vunpack.c.l.b16 %v495
        %v1520 = vunpack.c.l.b16 %v496
        %v1521 = vunpack.c.l.b16 %v497
        %v1522 = vunpack.c.l.b16 %v498
        %v1523 = vunpack.c.l.b16 %v499
        %v1524 = vunpack.c.l.b16 %v500
        %v1525 = vunpack.c.l.b16 %v501
        %v1526 = vunpack.c.l.b16 %v502
        %v1527 = vunpack.c.l.b16 %v503
        %v1528 = vunpack.c.l.b16 %v504
        %v1529 = vunpack.c.l.b16 %v505
        %v1530 = vunpack.c.l.b16 %v506
        %v1531 = vunpack.c.l.b16 %v507
        %v1532 = vunpack.c.l.b16 %v508
        %v1533 = vunpack.c.l.b16 %v509
        %v1534 = vunpack.c.l.b16 %v510
        %v1535 = vunpack.c.l.b16 %v511
        %v1536 = vunpack.c.l.b16 %v512
        %v1537 = vunpack.c.l.b16 %v513
        %v1538 = vunpack.c.l.b16 %v514
        %v1539 = vunpack.c.l.b16 %v515
        %v1540 = vunpack.c.l.b16 %v516
        %v1541 = vunpack.c.l.b16 %v517
        %v1542 = vunpack.c.l.b16 %v518
        %v1543 = vunpack.c.l.b16 %v519
        %v1544 = vunpack.c.l.b16 %v520
        %v1545 = vunpack.c.l.b16 %v521
        %v1546 = vunpack.c.l.b16 %v522
        %v1547 = vunpack.c.l.b16 %v523
        %v1548 = vunpack.c.l.b16 %v524
        %v1549 = vunpack.c.l.b16 %v525
        %v1550 = vpack.c.b16 %v1407, %v1406
        %v1551 = vpack.c.b16 %v1409, %v1408
        %v1552 = vpack.c.b16 %v1411, %v1410
        %v1553 = vpack.c.b16 %v1413, %v1412
        %v1554 = vpack.c.b16 %v1415, %v1414
        %v1555 = vpack.c.b16 %v1417, %v1416
        %v1556 = vpack.c.b16 %v1419, %v1418
        %v1557 = vpack.c.b16 %v1421, %v1420
        %v1558 = vpack.c.b16 %v1423, %v1422
        %v1559 = vpack.c.b16 %v1425, %v1424
        %v1560 = vpack.c.b16 %v1427, %v1426
        %v1561 = vpack.c.b16 %v1429, %v1428
        %v1562 = vpack.c.b16 %v1431, %v1430
        %v1563 = vpack.c.b16 %v1433, %v1432
        %v1564 = vpack.c.b16 %v1435, %v1434
        %v1565 = vpack.c.b16 %v1437, %v1436
        %v1566 = vpack.c.b16 %v1439, %v1438
        %v1567 = vpack.c.b16 %v1441, %v1440
        %v1568 = vpack.c.b16 %v1443, %v1442
        %v1569 = vpack.c.b16 %v1445, %v1444
        %v1570 = vpack.c.b16 %v1447, %v1446
        %v1571 = vpack.c.b16 %v1449, %v1448
        %v1572 = vpack.c.b16 %v1451, %v1450
        %v1573 = vpack.c.b16 %v1453, %v1452
        %v1574 = vpack.c.b16 %v1455, %v1454
        %v1575 = vpack.c.b16 %v1457, %v1456
        %v1576 = vpack.c.b16 %v1459, %v1458
        %v1577 = vpack.c.b16 %v1461, %v1460
        %v1578 = vpack.c.b16 %v1463, %v1462
        %v1579 = vpack.c.b16 %v1465, %v1464
        %v1580 = vpack.c.b16 %v1467, %v1466
        %v1581 = vpack.c.b16 %v1469, %v1468
        %v1582 = vpack.c.b16 %v1471, %v1470
        %v1583 = vpack.c.b16 %v1473, %v1472
        %v1584 = vpack.c.b16 %v1475, %v1474
        %v1585 = vpack.c.b16 %v1477, %v1476
        %v1586 = vpack.c.b16 %v1479, %v1478
        %v1587 = vpack.c.b16 %v1481, %v1480
        %v1588 = vpack.c.b16 %v1483, %v1482
        %v1589 = vpack.c.b16 %v1485, %v1484
        %v1590 = vpack.c.b16 %v1487, %v1486
        %v1591 = vpack.c.b16 %v1489, %v1488
        %v1592 = vpack.c.b16 %v1491, %v1490
        %v1593 = vpack.c.b16 %v1493, %v1492
        %v1594 = vpack.c.b16 %v1495, %v1494
        %v1595 = vpack.c.b16 %v1497, %v1496
        %v1596 = vpack.c.b16 %v1499, %v1498
        %v1597 = vpack.c.b16 %v1501, %v1500
        %v1598 = vpack.c.b16 %v1503, %v1502
        %v1599 = vpack.c.b16 %v1505, %v1504
        %v1600 = vpack.c.b16 %v1507, %v1506
        %v1601 = vpack.c.b16 %v1509, %v1508
        %v1602 = vpack.c.b16 %v1511, %v1510
        %v1603 = vpack.c.b16 %v1513, %v1512
        %v1604 = vpack.c.b16 %v1515, %v1514
        %v1605 = vpack.c.b16 %v1517, %v1516
        %v1606 = vpack.c.b16 %v1519, %v1518
        %v1607 = vpack.c.b16 %v1521, %v1520
        %v1608 = vpack.c.b16 %v1523, %v1522
        %v1609 = vpack.c.b16 %v1525, %v1524
        %v1610 = vpack.c.b16 %v1527, %v1526
        %v1611 = vpack.c.b16 %v1529, %v1528
        %v1612 = vpack.c.b16 %v1531, %v1530
        %v1613 = vpack.c.b16 %v1533, %v1532
        %v1614 = vpack.c.b16 %v1535, %v1534
        %v1615 = vpack.c.b16 %v1537, %v1536
        %v1616 = vpack.c.b16 %v1539, %v1538
        %v1617 = vpack.c.b16 %v1541, %v1540
        %v1618 = vpack.c.b16 %v1543, %v1542
        %v1619 = vpack.c.b16 %v1545, %v1544
        %v1620 = vpack.c.b16 %v1547, %v1546
        %v1621 = vpack.c.b16 %v1549, %v1548
        %1694 = vmatpush.bf16.msra.mxu0 %v1557
        %1695 = vmatpush.bf16.msra.mxu0 %v1556
        %1696 = vmatpush.bf16.msra.mxu0 %v1555
        %1697 = vmatpush.bf16.msra.mxu0 %v1554
        %1698 = vmatpush.bf16.msra.mxu0 %v1553
        %1699 = vmatpush.bf16.msra.mxu0 %v1552
        %1700 = vmatpush.bf16.msra.mxu0 %v1551
        %1701 = vmatpush.bf16.msra.mxu0 %v1550
        %1702 = vmatmul.bf16.gmra.mxu0 %v974
        %v1703 = vpop.f32.mrf.mxu0
        %v1704 = vadd.f32 0.0, %v1703
        %v1705 = vpop.f32.mrf.mxu0
        %v1706 = vadd.f32 0.0, %v1705
        %1707 = vmatmul.bf16.gmra.mxu0 %v983
        %v1708 = vpop.f32.mrf.mxu0
        %v1709 = vadd.f32 0.0, %v1708
        %v1710 = vpop.f32.mrf.mxu0
        %v1711 = vadd.f32 0.0, %v1710
        %1712 = vmatmul.bf16.gmra.mxu0 %v992
        %v1713 = vpop.f32.mrf.mxu0
        %v1714 = vadd.f32 0.0, %v1713
        %v1715 = vpop.f32.mrf.mxu0
        %v1716 = vadd.f32 0.0, %v1715
        %1717 = vmatmul.bf16.gmra.mxu0 %v1001
        %v1718 = vpop.f32.mrf.mxu0
        %v1719 = vadd.f32 0.0, %v1718
        %v1720 = vpop.f32.mrf.mxu0
        %v1721 = vadd.f32 0.0, %v1720
        %1722 = vmatmul.bf16.gmra.mxu0 %v1010
        %v1723 = vpop.f32.mrf.mxu0
        %v1724 = vadd.f32 0.0, %v1723
        %v1725 = vpop.f32.mrf.mxu0
        %v1726 = vadd.f32 0.0, %v1725
        %1727 = vmatmul.bf16.gmra.mxu0 %v1019
        %v1728 = vpop.f32.mrf.mxu0
        %v1729 = vadd.f32 0.0, %v1728
        %v1730 = vpop.f32.mrf.mxu0
        %v1731 = vadd.f32 0.0, %v1730
        %1732 = vmatmul.bf16.gmra.mxu0 %v1028
        %v1733 = vpop.f32.mrf.mxu0
        %v1734 = vadd.f32 0.0, %v1733
        %v1735 = vpop.f32.mrf.mxu0
        %v1736 = vadd.f32 0.0, %v1735
        %1737 = vmatmul.bf16.gmra.mxu0 %v1037
        %v1738 = vpop.f32.mrf.mxu0
        %v1739 = vadd.f32 0.0, %v1738
        %v1740 = vpop.f32.mrf.mxu0
        %v1741 = vadd.f32 0.0, %v1740
        %1742 = vmatmul.bf16.gmra.mxu0 %v1046
        %v1743 = vpop.f32.mrf.mxu0
        %v1744 = vadd.f32 0.0, %v1743
        %v1745 = vpop.f32.mrf.mxu0
        %v1746 = vadd.f32 0.0, %v1745
        %1747 = vmatmul.bf16.gmra.mxu0 %v1055
        %v1748 = vpop.f32.mrf.mxu0
        %v1749 = vadd.f32 0.0, %v1748
        %v1750 = vpop.f32.mrf.mxu0
        %v1751 = vadd.f32 0.0, %v1750
        %1752 = vmatmul.bf16.gmra.mxu0 %v1064
        %v1753 = vpop.f32.mrf.mxu0
        %v1754 = vadd.f32 0.0, %v1753
        %v1755 = vpop.f32.mrf.mxu0
        %v1756 = vadd.f32 0.0, %v1755
        %1757 = vmatmul.bf16.gmra.mxu0 %v1073
        %v1758 = vpop.f32.mrf.mxu0
        %v1759 = vadd.f32 0.0, %v1758
        %v1760 = vpop.f32.mrf.mxu0
        %v1761 = vadd.f32 0.0, %v1760
        %1762 = vmatmul.bf16.gmra.mxu0 %v1082
        %v1763 = vpop.f32.mrf.mxu0
        %v1764 = vadd.f32 0.0, %v1763
        %v1765 = vpop.f32.mrf.mxu0
        %v1766 = vadd.f32 0.0, %v1765
        %1767 = vmatmul.bf16.gmra.mxu0 %v1091
        %v1768 = vpop.f32.mrf.mxu0
        %v1769 = vadd.f32 0.0, %v1768
        %v1770 = vpop.f32.mrf.mxu0
        %v1771 = vadd.f32 0.0, %v1770
        %1772 = vmatmul.bf16.gmra.mxu0 %v1100
        %v1773 = vpop.f32.mrf.mxu0
        %v1774 = vadd.f32 0.0, %v1773
        %v1775 = vpop.f32.mrf.mxu0
        %v1776 = vadd.f32 0.0, %v1775
        %1777 = vmatmul.bf16.gmra.mxu0 %v1109
        %v1778 = vpop.f32.mrf.mxu0
        %v1779 = vadd.f32 0.0, %v1778
        %v1780 = vpop.f32.mrf.mxu0
        %v1781 = vadd.f32 0.0, %v1780
        %1782 = vdwg.mxu0
        %1783 = vmatpush.bf16.msra.mxu0 %v1565
        %1784 = vmatpush.bf16.msra.mxu0 %v1564
        %1785 = vmatpush.bf16.msra.mxu0 %v1563
        %1786 = vmatpush.bf16.msra.mxu0 %v1562
        %1787 = vmatpush.bf16.msra.mxu0 %v1561
        %1788 = vmatpush.bf16.msra.mxu0 %v1560
        %1789 = vmatpush.bf16.msra.mxu0 %v1559
        %1790 = vmatpush.bf16.msra.mxu0 %v1558
        %1791 = vmatmul.bf16.gmra.mxu0 %v975
        %v1792 = vpop.f32.mrf.mxu0
        %v1793 = vadd.f32 %v1704, %v1792
        %v1794 = vpop.f32.mrf.mxu0
        %v1795 = vadd.f32 %v1706, %v1794
        %1796 = vmatmul.bf16.gmra.mxu0 %v984
        %v1797 = vpop.f32.mrf.mxu0
        %v1798 = vadd.f32 %v1709, %v1797
        %v1799 = vpop.f32.mrf.mxu0
        %v1800 = vadd.f32 %v1711, %v1799
        %1801 = vmatmul.bf16.gmra.mxu0 %v993
        %v1802 = vpop.f32.mrf.mxu0
        %v1803 = vadd.f32 %v1714, %v1802
        %v1804 = vpop.f32.mrf.mxu0
        %v1805 = vadd.f32 %v1716, %v1804
        %1806 = vmatmul.bf16.gmra.mxu0 %v1002
        %v1807 = vpop.f32.mrf.mxu0
        %v1808 = vadd.f32 %v1719, %v1807
        %v1809 = vpop.f32.mrf.mxu0
        %v1810 = vadd.f32 %v1721, %v1809
        %1811 = vmatmul.bf16.gmra.mxu0 %v1011
        %v1812 = vpop.f32.mrf.mxu0
        %v1813 = vadd.f32 %v1724, %v1812
        %v1814 = vpop.f32.mrf.mxu0
        %v1815 = vadd.f32 %v1726, %v1814
        %1816 = vmatmul.bf16.gmra.mxu0 %v1020
        %v1817 = vpop.f32.mrf.mxu0
        %v1818 = vadd.f32 %v1729, %v1817
        %v1819 = vpop.f32.mrf.mxu0
        %v1820 = vadd.f32 %v1731, %v1819
        %1821 = vmatmul.bf16.gmra.mxu0 %v1029
        %v1822 = vpop.f32.mrf.mxu0
        %v1823 = vadd.f32 %v1734, %v1822
        %v1824 = vpop.f32.mrf.mxu0
        %v1825 = vadd.f32 %v1736, %v1824
        %1826 = vmatmul.bf16.gmra.mxu0 %v1038
        %v1827 = vpop.f32.mrf.mxu0
        %v1828 = vadd.f32 %v1739, %v1827
        %v1829 = vpop.f32.mrf.mxu0
        %v1830 = vadd.f32 %v1741, %v1829
        %1831 = vmatmul.bf16.gmra.mxu0 %v1047
        %v1832 = vpop.f32.mrf.mxu0
        %v1833 = vadd.f32 %v1744, %v1832
        %v1834 = vpop.f32.mrf.mxu0
        %v1835 = vadd.f32 %v1746, %v1834
        %1836 = vmatmul.bf16.gmra.mxu0 %v1056
        %v1837 = vpop.f32.mrf.mxu0
        %v1838 = vadd.f32 %v1749, %v1837
        %v1839 = vpop.f32.mrf.mxu0
        %v1840 = vadd.f32 %v1751, %v1839
        %1841 = vmatmul.bf16.gmra.mxu0 %v1065
        %v1842 = vpop.f32.mrf.mxu0
        %v1843 = vadd.f32 %v1754, %v1842
        %v1844 = vpop.f32.mrf.mxu0
        %v1845 = vadd.f32 %v1756, %v1844
        %1846 = vmatmul.bf16.gmra.mxu0 %v1074
        %v1847 = vpop.f32.mrf.mxu0
        %v1848 = vadd.f32 %v1759, %v1847
        %v1849 = vpop.f32.mrf.mxu0
        %v1850 = vadd.f32 %v1761, %v1849
        %1851 = vmatmul.bf16.gmra.mxu0 %v1083
        %v1852 = vpop.f32.mrf.mxu0
        %v1853 = vadd.f32 %v1764, %v1852
        %v1854 = vpop.f32.mrf.mxu0
        %v1855 = vadd.f32 %v1766, %v1854
        %1856 = vmatmul.bf16.gmra.mxu0 %v1092
        %v1857 = vpop.f32.mrf.mxu0
        %v1858 = vadd.f32 %v1769, %v1857
        %v1859 = vpop.f32.mrf.mxu0
        %v1860 = vadd.f32 %v1771, %v1859
        %1861 = vmatmul.bf16.gmra.mxu0 %v1101
        %v1862 = vpop.f32.mrf.mxu0
        %v1863 = vadd.f32 %v1774, %v1862
        %v1864 = vpop.f32.mrf.mxu0
        %v1865 = vadd.f32 %v1776, %v1864
        %1866 = vmatmul.bf16.gmra.mxu0 %v1110
        %v1867 = vpop.f32.mrf.mxu0
        %v1868 = vadd.f32 %v1779, %v1867
        %v1869 = vpop.f32.mrf.mxu0
        %v1870 = vadd.f32 %v1781, %v1869
        %1871 = vdwg.mxu0
        %1872 = vmatpush.bf16.msra.mxu0 %v1573
        %1873 = vmatpush.bf16.msra.mxu0 %v1572
        %1874 = vmatpush.bf16.msra.mxu0 %v1571
        %1875 = vmatpush.bf16.msra.mxu0 %v1570
        %1876 = vmatpush.bf16.msra.mxu0 %v1569
        %1877 = vmatpush.bf16.msra.mxu0 %v1568
        %1878 = vmatpush.bf16.msra.mxu0 %v1567
        %1879 = vmatpush.bf16.msra.mxu0 %v1566
        %1880 = vmatmul.bf16.gmra.mxu0 %v976
        %v1881 = vpop.f32.mrf.mxu0
        %v1882 = vadd.f32 %v1793, %v1881
        %v1883 = vpop.f32.mrf.mxu0
        %v1884 = vadd.f32 %v1795, %v1883
        %1885 = vmatmul.bf16.gmra.mxu0 %v985
        %v1886 = vpop.f32.mrf.mxu0
        %v1887 = vadd.f32 %v1798, %v1886
        %v1888 = vpop.f32.mrf.mxu0
        %v1889 = vadd.f32 %v1800, %v1888
        %1890 = vmatmul.bf16.gmra.mxu0 %v994
        %v1891 = vpop.f32.mrf.mxu0
        %v1892 = vadd.f32 %v1803, %v1891
        %v1893 = vpop.f32.mrf.mxu0
        %v1894 = vadd.f32 %v1805, %v1893
        %1895 = vmatmul.bf16.gmra.mxu0 %v1003
        %v1896 = vpop.f32.mrf.mxu0
        %v1897 = vadd.f32 %v1808, %v1896
        %v1898 = vpop.f32.mrf.mxu0
        %v1899 = vadd.f32 %v1810, %v1898
        %1900 = vmatmul.bf16.gmra.mxu0 %v1012
        %v1901 = vpop.f32.mrf.mxu0
        %v1902 = vadd.f32 %v1813, %v1901
        %v1903 = vpop.f32.mrf.mxu0
        %v1904 = vadd.f32 %v1815, %v1903
        %1905 = vmatmul.bf16.gmra.mxu0 %v1021
        %v1906 = vpop.f32.mrf.mxu0
        %v1907 = vadd.f32 %v1818, %v1906
        %v1908 = vpop.f32.mrf.mxu0
        %v1909 = vadd.f32 %v1820, %v1908
        %1910 = vmatmul.bf16.gmra.mxu0 %v1030
        %v1911 = vpop.f32.mrf.mxu0
        %v1912 = vadd.f32 %v1823, %v1911
        %v1913 = vpop.f32.mrf.mxu0
        %v1914 = vadd.f32 %v1825, %v1913
        %1915 = vmatmul.bf16.gmra.mxu0 %v1039
        %v1916 = vpop.f32.mrf.mxu0
        %v1917 = vadd.f32 %v1828, %v1916
        %v1918 = vpop.f32.mrf.mxu0
        %v1919 = vadd.f32 %v1830, %v1918
        %1920 = vmatmul.bf16.gmra.mxu0 %v1048
        %v1921 = vpop.f32.mrf.mxu0
        %v1922 = vadd.f32 %v1833, %v1921
        %v1923 = vpop.f32.mrf.mxu0
        %v1924 = vadd.f32 %v1835, %v1923
        %1925 = vmatmul.bf16.gmra.mxu0 %v1057
        %v1926 = vpop.f32.mrf.mxu0
        %v1927 = vadd.f32 %v1838, %v1926
        %v1928 = vpop.f32.mrf.mxu0
        %v1929 = vadd.f32 %v1840, %v1928
        %1930 = vmatmul.bf16.gmra.mxu0 %v1066
        %v1931 = vpop.f32.mrf.mxu0
        %v1932 = vadd.f32 %v1843, %v1931
        %v1933 = vpop.f32.mrf.mxu0
        %v1934 = vadd.f32 %v1845, %v1933
        %1935 = vmatmul.bf16.gmra.mxu0 %v1075
        %v1936 = vpop.f32.mrf.mxu0
        %v1937 = vadd.f32 %v1848, %v1936
        %v1938 = vpop.f32.mrf.mxu0
        %v1939 = vadd.f32 %v1850, %v1938
        %1940 = vmatmul.bf16.gmra.mxu0 %v1084
        %v1941 = vpop.f32.mrf.mxu0
        %v1942 = vadd.f32 %v1853, %v1941
        %v1943 = vpop.f32.mrf.mxu0
        %v1944 = vadd.f32 %v1855, %v1943
        %1945 = vmatmul.bf16.gmra.mxu0 %v1093
        %v1946 = vpop.f32.mrf.mxu0
        %v1947 = vadd.f32 %v1858, %v1946
        %v1948 = vpop.f32.mrf.mxu0
        %v1949 = vadd.f32 %v1860, %v1948
        %1950 = vmatmul.bf16.gmra.mxu0 %v1102
        %v1951 = vpop.f32.mrf.mxu0
        %v1952 = vadd.f32 %v1863, %v1951
        %v1953 = vpop.f32.mrf.mxu0
        %v1954 = vadd.f32 %v1865, %v1953
        %1955 = vmatmul.bf16.gmra.mxu0 %v1111
        %v1956 = vpop.f32.mrf.mxu0
        %v1957 = vadd.f32 %v1868, %v1956
        %v1958 = vpop.f32.mrf.mxu0
        %v1959 = vadd.f32 %v1870, %v1958
        %1960 = vdwg.mxu0
        %1961 = vmatpush.bf16.msra.mxu0 %v1581
        %1962 = vmatpush.bf16.msra.mxu0 %v1580
        %1963 = vmatpush.bf16.msra.mxu0 %v1579
        %1964 = vmatpush.bf16.msra.mxu0 %v1578
        %1965 = vmatpush.bf16.msra.mxu0 %v1577
        %1966 = vmatpush.bf16.msra.mxu0 %v1576
        %1967 = vmatpush.bf16.msra.mxu0 %v1575
        %1968 = vmatpush.bf16.msra.mxu0 %v1574
        %1969 = vmatmul.bf16.gmra.mxu0 %v977
        %v1970 = vpop.f32.mrf.mxu0
        %v1971 = vadd.f32 %v1882, %v1970
        %v1972 = vpop.f32.mrf.mxu0
        %v1973 = vadd.f32 %v1884, %v1972
        %1974 = vmatmul.bf16.gmra.mxu0 %v986
        %v1975 = vpop.f32.mrf.mxu0
        %v1976 = vadd.f32 %v1887, %v1975
        %v1977 = vpop.f32.mrf.mxu0
        %v1978 = vadd.f32 %v1889, %v1977
        %1979 = vmatmul.bf16.gmra.mxu0 %v995
        %v1980 = vpop.f32.mrf.mxu0
        %v1981 = vadd.f32 %v1892, %v1980
        %v1982 = vpop.f32.mrf.mxu0
        %v1983 = vadd.f32 %v1894, %v1982
        %1984 = vmatmul.bf16.gmra.mxu0 %v1004
        %v1985 = vpop.f32.mrf.mxu0
        %v1986 = vadd.f32 %v1897, %v1985
        %v1987 = vpop.f32.mrf.mxu0
        %v1988 = vadd.f32 %v1899, %v1987
        %1989 = vmatmul.bf16.gmra.mxu0 %v1013
        %v1990 = vpop.f32.mrf.mxu0
        %v1991 = vadd.f32 %v1902, %v1990
        %v1992 = vpop.f32.mrf.mxu0
        %v1993 = vadd.f32 %v1904, %v1992
        %1994 = vmatmul.bf16.gmra.mxu0 %v1022
        %v1995 = vpop.f32.mrf.mxu0
        %v1996 = vadd.f32 %v1907, %v1995
        %v1997 = vpop.f32.mrf.mxu0
        %v1998 = vadd.f32 %v1909, %v1997
        %1999 = vmatmul.bf16.gmra.mxu0 %v1031
        %v2000 = vpop.f32.mrf.mxu0
        %v2001 = vadd.f32 %v1912, %v2000
        %v2002 = vpop.f32.mrf.mxu0
        %v2003 = vadd.f32 %v1914, %v2002
        %2004 = vmatmul.bf16.gmra.mxu0 %v1040
        %v2005 = vpop.f32.mrf.mxu0
        %v2006 = vadd.f32 %v1917, %v2005
        %v2007 = vpop.f32.mrf.mxu0
        %v2008 = vadd.f32 %v1919, %v2007
        %2009 = vmatmul.bf16.gmra.mxu0 %v1049
        %v2010 = vpop.f32.mrf.mxu0
        %v2011 = vadd.f32 %v1922, %v2010
        %v2012 = vpop.f32.mrf.mxu0
        %v2013 = vadd.f32 %v1924, %v2012
        %2014 = vmatmul.bf16.gmra.mxu0 %v1058
        %v2015 = vpop.f32.mrf.mxu0
        %v2016 = vadd.f32 %v1927, %v2015
        %v2017 = vpop.f32.mrf.mxu0
        %v2018 = vadd.f32 %v1929, %v2017
        %2019 = vmatmul.bf16.gmra.mxu0 %v1067
        %v2020 = vpop.f32.mrf.mxu0
        %v2021 = vadd.f32 %v1932, %v2020
        %v2022 = vpop.f32.mrf.mxu0
        %v2023 = vadd.f32 %v1934, %v2022
        %2024 = vmatmul.bf16.gmra.mxu0 %v1076
        %v2025 = vpop.f32.mrf.mxu0
        %v2026 = vadd.f32 %v1937, %v2025
        %v2027 = vpop.f32.mrf.mxu0
        %v2028 = vadd.f32 %v1939, %v2027
        %2029 = vmatmul.bf16.gmra.mxu0 %v1085
        %v2030 = vpop.f32.mrf.mxu0
        %v2031 = vadd.f32 %v1942, %v2030
        %v2032 = vpop.f32.mrf.mxu0
        %v2033 = vadd.f32 %v1944, %v2032
        %2034 = vmatmul.bf16.gmra.mxu0 %v1094
        %v2035 = vpop.f32.mrf.mxu0
        %v2036 = vadd.f32 %v1947, %v2035
        %v2037 = vpop.f32.mrf.mxu0
        %v2038 = vadd.f32 %v1949, %v2037
        %2039 = vmatmul.bf16.gmra.mxu0 %v1103
        %v2040 = vpop.f32.mrf.mxu0
        %v2041 = vadd.f32 %v1952, %v2040
        %v2042 = vpop.f32.mrf.mxu0
        %v2043 = vadd.f32 %v1954, %v2042
        %2044 = vmatmul.bf16.gmra.mxu0 %v1112
        %v2045 = vpop.f32.mrf.mxu0
        %v2046 = vadd.f32 %v1957, %v2045
        %v2047 = vpop.f32.mrf.mxu0
        %v2048 = vadd.f32 %v1959, %v2047
        %2049 = vdwg.mxu0
        %2050 = vmatpush.bf16.msra.mxu0 %v1589
        %2051 = vmatpush.bf16.msra.mxu0 %v1588
        %2052 = vmatpush.bf16.msra.mxu0 %v1587
        %2053 = vmatpush.bf16.msra.mxu0 %v1586
        %2054 = vmatpush.bf16.msra.mxu0 %v1585
        %2055 = vmatpush.bf16.msra.mxu0 %v1584
        %2056 = vmatpush.bf16.msra.mxu0 %v1583
        %2057 = vmatpush.bf16.msra.mxu0 %v1582
        %2058 = vmatmul.bf16.gmra.mxu0 %v978
        %v2059 = vpop.f32.mrf.mxu0
        %v2060 = vadd.f32 %v1971, %v2059
        %v2061 = vpop.f32.mrf.mxu0
        %v2062 = vadd.f32 %v1973, %v2061
        %2063 = vmatmul.bf16.gmra.mxu0 %v987
        %v2064 = vpop.f32.mrf.mxu0
        %v2065 = vadd.f32 %v1976, %v2064
        %v2066 = vpop.f32.mrf.mxu0
        %v2067 = vadd.f32 %v1978, %v2066
        %2068 = vmatmul.bf16.gmra.mxu0 %v996
        %v2069 = vpop.f32.mrf.mxu0
        %v2070 = vadd.f32 %v1981, %v2069
        %v2071 = vpop.f32.mrf.mxu0
        %v2072 = vadd.f32 %v1983, %v2071
        %2073 = vmatmul.bf16.gmra.mxu0 %v1005
        %v2074 = vpop.f32.mrf.mxu0
        %v2075 = vadd.f32 %v1986, %v2074
        %v2076 = vpop.f32.mrf.mxu0
        %v2077 = vadd.f32 %v1988, %v2076
        %2078 = vmatmul.bf16.gmra.mxu0 %v1014
        %v2079 = vpop.f32.mrf.mxu0
        %v2080 = vadd.f32 %v1991, %v2079
        %v2081 = vpop.f32.mrf.mxu0
        %v2082 = vadd.f32 %v1993, %v2081
        %2083 = vmatmul.bf16.gmra.mxu0 %v1023
        %v2084 = vpop.f32.mrf.mxu0
        %v2085 = vadd.f32 %v1996, %v2084
        %v2086 = vpop.f32.mrf.mxu0
        %v2087 = vadd.f32 %v1998, %v2086
        %2088 = vmatmul.bf16.gmra.mxu0 %v1032
        %v2089 = vpop.f32.mrf.mxu0
        %v2090 = vadd.f32 %v2001, %v2089
        %v2091 = vpop.f32.mrf.mxu0
        %v2092 = vadd.f32 %v2003, %v2091
        %2093 = vmatmul.bf16.gmra.mxu0 %v1041
        %v2094 = vpop.f32.mrf.mxu0
        %v2095 = vadd.f32 %v2006, %v2094
        %v2096 = vpop.f32.mrf.mxu0
        %v2097 = vadd.f32 %v2008, %v2096
        %2098 = vmatmul.bf16.gmra.mxu0 %v1050
        %v2099 = vpop.f32.mrf.mxu0
        %v2100 = vadd.f32 %v2011, %v2099
        %v2101 = vpop.f32.mrf.mxu0
        %v2102 = vadd.f32 %v2013, %v2101
        %2103 = vmatmul.bf16.gmra.mxu0 %v1059
        %v2104 = vpop.f32.mrf.mxu0
        %v2105 = vadd.f32 %v2016, %v2104
        %v2106 = vpop.f32.mrf.mxu0
        %v2107 = vadd.f32 %v2018, %v2106
        %2108 = vmatmul.bf16.gmra.mxu0 %v1068
        %v2109 = vpop.f32.mrf.mxu0
        %v2110 = vadd.f32 %v2021, %v2109
        %v2111 = vpop.f32.mrf.mxu0
        %v2112 = vadd.f32 %v2023, %v2111
        %2113 = vmatmul.bf16.gmra.mxu0 %v1077
        %v2114 = vpop.f32.mrf.mxu0
        %v2115 = vadd.f32 %v2026, %v2114
        %v2116 = vpop.f32.mrf.mxu0
        %v2117 = vadd.f32 %v2028, %v2116
        %2118 = vmatmul.bf16.gmra.mxu0 %v1086
        %v2119 = vpop.f32.mrf.mxu0
        %v2120 = vadd.f32 %v2031, %v2119
        %v2121 = vpop.f32.mrf.mxu0
        %v2122 = vadd.f32 %v2033, %v2121
        %2123 = vmatmul.bf16.gmra.mxu0 %v1095
        %v2124 = vpop.f32.mrf.mxu0
        %v2125 = vadd.f32 %v2036, %v2124
        %v2126 = vpop.f32.mrf.mxu0
        %v2127 = vadd.f32 %v2038, %v2126
        %2128 = vmatmul.bf16.gmra.mxu0 %v1104
        %v2129 = vpop.f32.mrf.mxu0
        %v2130 = vadd.f32 %v2041, %v2129
        %v2131 = vpop.f32.mrf.mxu0
        %v2132 = vadd.f32 %v2043, %v2131
        %2133 = vmatmul.bf16.gmra.mxu0 %v1113
        %v2134 = vpop.f32.mrf.mxu0
        %v2135 = vadd.f32 %v2046, %v2134
        %v2136 = vpop.f32.mrf.mxu0
        %v2137 = vadd.f32 %v2048, %v2136
        %2138 = vdwg.mxu0
        %2139 = vmatpush.bf16.msra.mxu0 %v1597
        %2140 = vmatpush.bf16.msra.mxu0 %v1596
        %2141 = vmatpush.bf16.msra.mxu0 %v1595
        %2142 = vmatpush.bf16.msra.mxu0 %v1594
        %2143 = vmatpush.bf16.msra.mxu0 %v1593
        %2144 = vmatpush.bf16.msra.mxu0 %v1592
        %2145 = vmatpush.bf16.msra.mxu0 %v1591
        %2146 = vmatpush.bf16.msra.mxu0 %v1590
        %2147 = vmatmul.bf16.gmra.mxu0 %v979
        %v2148 = vpop.f32.mrf.mxu0
        %v2149 = vadd.f32 %v2060, %v2148
        %v2150 = vpop.f32.mrf.mxu0
        %v2151 = vadd.f32 %v2062, %v2150
        %2152 = vmatmul.bf16.gmra.mxu0 %v988
        %v2153 = vpop.f32.mrf.mxu0
        %v2154 = vadd.f32 %v2065, %v2153
        %v2155 = vpop.f32.mrf.mxu0
        %v2156 = vadd.f32 %v2067, %v2155
        %2157 = vmatmul.bf16.gmra.mxu0 %v997
        %v2158 = vpop.f32.mrf.mxu0
        %v2159 = vadd.f32 %v2070, %v2158
        %v2160 = vpop.f32.mrf.mxu0
        %v2161 = vadd.f32 %v2072, %v2160
        %2162 = vmatmul.bf16.gmra.mxu0 %v1006
        %v2163 = vpop.f32.mrf.mxu0
        %v2164 = vadd.f32 %v2075, %v2163
        %v2165 = vpop.f32.mrf.mxu0
        %v2166 = vadd.f32 %v2077, %v2165
        %2167 = vmatmul.bf16.gmra.mxu0 %v1015
        %v2168 = vpop.f32.mrf.mxu0
        %v2169 = vadd.f32 %v2080, %v2168
        %v2170 = vpop.f32.mrf.mxu0
        %v2171 = vadd.f32 %v2082, %v2170
        %2172 = vmatmul.bf16.gmra.mxu0 %v1024
        %v2173 = vpop.f32.mrf.mxu0
        %v2174 = vadd.f32 %v2085, %v2173
        %v2175 = vpop.f32.mrf.mxu0
        %v2176 = vadd.f32 %v2087, %v2175
        %2177 = vmatmul.bf16.gmra.mxu0 %v1033
        %v2178 = vpop.f32.mrf.mxu0
        %v2179 = vadd.f32 %v2090, %v2178
        %v2180 = vpop.f32.mrf.mxu0
        %v2181 = vadd.f32 %v2092, %v2180
        %2182 = vmatmul.bf16.gmra.mxu0 %v1042
        %v2183 = vpop.f32.mrf.mxu0
        %v2184 = vadd.f32 %v2095, %v2183
        %v2185 = vpop.f32.mrf.mxu0
        %v2186 = vadd.f32 %v2097, %v2185
        %2187 = vmatmul.bf16.gmra.mxu0 %v1051
        %v2188 = vpop.f32.mrf.mxu0
        %v2189 = vadd.f32 %v2100, %v2188
        %v2190 = vpop.f32.mrf.mxu0
        %v2191 = vadd.f32 %v2102, %v2190
        %2192 = vmatmul.bf16.gmra.mxu0 %v1060
        %v2193 = vpop.f32.mrf.mxu0
        %v2194 = vadd.f32 %v2105, %v2193
        %v2195 = vpop.f32.mrf.mxu0
        %v2196 = vadd.f32 %v2107, %v2195
        %2197 = vmatmul.bf16.gmra.mxu0 %v1069
        %v2198 = vpop.f32.mrf.mxu0
        %v2199 = vadd.f32 %v2110, %v2198
        %v2200 = vpop.f32.mrf.mxu0
        %v2201 = vadd.f32 %v2112, %v2200
        %2202 = vmatmul.bf16.gmra.mxu0 %v1078
        %v2203 = vpop.f32.mrf.mxu0
        %v2204 = vadd.f32 %v2115, %v2203
        %v2205 = vpop.f32.mrf.mxu0
        %v2206 = vadd.f32 %v2117, %v2205
        %2207 = vmatmul.bf16.gmra.mxu0 %v1087
        %v2208 = vpop.f32.mrf.mxu0
        %v2209 = vadd.f32 %v2120, %v2208
        %v2210 = vpop.f32.mrf.mxu0
        %v2211 = vadd.f32 %v2122, %v2210
        %2212 = vmatmul.bf16.gmra.mxu0 %v1096
        %v2213 = vpop.f32.mrf.mxu0
        %v2214 = vadd.f32 %v2125, %v2213
        %v2215 = vpop.f32.mrf.mxu0
        %v2216 = vadd.f32 %v2127, %v2215
        %2217 = vmatmul.bf16.gmra.mxu0 %v1105
        %v2218 = vpop.f32.mrf.mxu0
        %v2219 = vadd.f32 %v2130, %v2218
        %v2220 = vpop.f32.mrf.mxu0
        %v2221 = vadd.f32 %v2132, %v2220
        %2222 = vmatmul.bf16.gmra.mxu0 %v1114
        %v2223 = vpop.f32.mrf.mxu0
        %v2224 = vadd.f32 %v2135, %v2223
        %v2225 = vpop.f32.mrf.mxu0
        %v2226 = vadd.f32 %v2137, %v2225
        %2227 = vdwg.mxu0
        %2228 = vmatpush.bf16.msra.mxu0 %v1605
        %2229 = vmatpush.bf16.msra.mxu0 %v1604
        %2230 = vmatpush.bf16.msra.mxu0 %v1603
        %2231 = vmatpush.bf16.msra.mxu0 %v1602
        %2232 = vmatpush.bf16.msra.mxu0 %v1601
        %2233 = vmatpush.bf16.msra.mxu0 %v1600
        %2234 = vmatpush.bf16.msra.mxu0 %v1599
        %2235 = vmatpush.bf16.msra.mxu0 %v1598
        %2236 = vmatmul.bf16.gmra.mxu0 %v980
        %v2237 = vpop.f32.mrf.mxu0
        %v2238 = vadd.f32 %v2149, %v2237
        %v2239 = vpop.f32.mrf.mxu0
        %v2240 = vadd.f32 %v2151, %v2239
        %2241 = vmatmul.bf16.gmra.mxu0 %v989
        %v2242 = vpop.f32.mrf.mxu0
        %v2243 = vadd.f32 %v2154, %v2242
        %v2244 = vpop.f32.mrf.mxu0
        %v2245 = vadd.f32 %v2156, %v2244
        %2246 = vmatmul.bf16.gmra.mxu0 %v998
        %v2247 = vpop.f32.mrf.mxu0
        %v2248 = vadd.f32 %v2159, %v2247
        %v2249 = vpop.f32.mrf.mxu0
        %v2250 = vadd.f32 %v2161, %v2249
        %2251 = vmatmul.bf16.gmra.mxu0 %v1007
        %v2252 = vpop.f32.mrf.mxu0
        %v2253 = vadd.f32 %v2164, %v2252
        %v2254 = vpop.f32.mrf.mxu0
        %v2255 = vadd.f32 %v2166, %v2254
        %2256 = vmatmul.bf16.gmra.mxu0 %v1016
        %v2257 = vpop.f32.mrf.mxu0
        %v2258 = vadd.f32 %v2169, %v2257
        %v2259 = vpop.f32.mrf.mxu0
        %v2260 = vadd.f32 %v2171, %v2259
        %2261 = vmatmul.bf16.gmra.mxu0 %v1025
        %v2262 = vpop.f32.mrf.mxu0
        %v2263 = vadd.f32 %v2174, %v2262
        %v2264 = vpop.f32.mrf.mxu0
        %v2265 = vadd.f32 %v2176, %v2264
        %2266 = vmatmul.bf16.gmra.mxu0 %v1034
        %v2267 = vpop.f32.mrf.mxu0
        %v2268 = vadd.f32 %v2179, %v2267
        %v2269 = vpop.f32.mrf.mxu0
        %v2270 = vadd.f32 %v2181, %v2269
        %2271 = vmatmul.bf16.gmra.mxu0 %v1043
        %v2272 = vpop.f32.mrf.mxu0
        %v2273 = vadd.f32 %v2184, %v2272
        %v2274 = vpop.f32.mrf.mxu0
        %v2275 = vadd.f32 %v2186, %v2274
        %2276 = vmatmul.bf16.gmra.mxu0 %v1052
        %v2277 = vpop.f32.mrf.mxu0
        %v2278 = vadd.f32 %v2189, %v2277
        %v2279 = vpop.f32.mrf.mxu0
        %v2280 = vadd.f32 %v2191, %v2279
        %2281 = vmatmul.bf16.gmra.mxu0 %v1061
        %v2282 = vpop.f32.mrf.mxu0
        %v2283 = vadd.f32 %v2194, %v2282
        %v2284 = vpop.f32.mrf.mxu0
        %v2285 = vadd.f32 %v2196, %v2284
        %2286 = vmatmul.bf16.gmra.mxu0 %v1070
        %v2287 = vpop.f32.mrf.mxu0
        %v2288 = vadd.f32 %v2199, %v2287
        %v2289 = vpop.f32.mrf.mxu0
        %v2290 = vadd.f32 %v2201, %v2289
        %2291 = vmatmul.bf16.gmra.mxu0 %v1079
        %v2292 = vpop.f32.mrf.mxu0
        %v2293 = vadd.f32 %v2204, %v2292
        %v2294 = vpop.f32.mrf.mxu0
        %v2295 = vadd.f32 %v2206, %v2294
        %2296 = vmatmul.bf16.gmra.mxu0 %v1088
        %v2297 = vpop.f32.mrf.mxu0
        %v2298 = vadd.f32 %v2209, %v2297
        %v2299 = vpop.f32.mrf.mxu0
        %v2300 = vadd.f32 %v2211, %v2299
        %2301 = vmatmul.bf16.gmra.mxu0 %v1097
        %v2302 = vpop.f32.mrf.mxu0
        %v2303 = vadd.f32 %v2214, %v2302
        %v2304 = vpop.f32.mrf.mxu0
        %v2305 = vadd.f32 %v2216, %v2304
        %2306 = vmatmul.bf16.gmra.mxu0 %v1106
        %v2307 = vpop.f32.mrf.mxu0
        %v2308 = vadd.f32 %v2219, %v2307
        %v2309 = vpop.f32.mrf.mxu0
        %v2310 = vadd.f32 %v2221, %v2309
        %2311 = vmatmul.bf16.gmra.mxu0 %v1115
        %v2312 = vpop.f32.mrf.mxu0
        %v2313 = vadd.f32 %v2224, %v2312
        %v2314 = vpop.f32.mrf.mxu0
        %v2315 = vadd.f32 %v2226, %v2314
        %2316 = vdwg.mxu0
        %2317 = vmatpush.bf16.msra.mxu0 %v1613
        %2318 = vmatpush.bf16.msra.mxu0 %v1612
        %2319 = vmatpush.bf16.msra.mxu0 %v1611
        %2320 = vmatpush.bf16.msra.mxu0 %v1610
        %2321 = vmatpush.bf16.msra.mxu0 %v1609
        %2322 = vmatpush.bf16.msra.mxu0 %v1608
        %2323 = vmatpush.bf16.msra.mxu0 %v1607
        %2324 = vmatpush.bf16.msra.mxu0 %v1606
        %2325 = vmatmul.bf16.gmra.mxu0 %v981
        %v2326 = vpop.f32.mrf.mxu0
        %v2327 = vadd.f32 %v2238, %v2326
        %v2328 = vpop.f32.mrf.mxu0
        %v2329 = vadd.f32 %v2240, %v2328
        %2330 = vmatmul.bf16.gmra.mxu0 %v990
        %v2331 = vpop.f32.mrf.mxu0
        %v2332 = vadd.f32 %v2243, %v2331
        %v2333 = vpop.f32.mrf.mxu0
        %v2334 = vadd.f32 %v2245, %v2333
        %2335 = vmatmul.bf16.gmra.mxu0 %v999
        %v2336 = vpop.f32.mrf.mxu0
        %v2337 = vadd.f32 %v2248, %v2336
        %v2338 = vpop.f32.mrf.mxu0
        %v2339 = vadd.f32 %v2250, %v2338
        %2340 = vmatmul.bf16.gmra.mxu0 %v1008
        %v2341 = vpop.f32.mrf.mxu0
        %v2342 = vadd.f32 %v2253, %v2341
        %v2343 = vpop.f32.mrf.mxu0
        %v2344 = vadd.f32 %v2255, %v2343
        %2345 = vmatmul.bf16.gmra.mxu0 %v1017
        %v2346 = vpop.f32.mrf.mxu0
        %v2347 = vadd.f32 %v2258, %v2346
        %v2348 = vpop.f32.mrf.mxu0
        %v2349 = vadd.f32 %v2260, %v2348
        %2350 = vmatmul.bf16.gmra.mxu0 %v1026
        %v2351 = vpop.f32.mrf.mxu0
        %v2352 = vadd.f32 %v2263, %v2351
        %v2353 = vpop.f32.mrf.mxu0
        %v2354 = vadd.f32 %v2265, %v2353
        %2355 = vmatmul.bf16.gmra.mxu0 %v1035
        %v2356 = vpop.f32.mrf.mxu0
        %v2357 = vadd.f32 %v2268, %v2356
        %v2358 = vpop.f32.mrf.mxu0
        %v2359 = vadd.f32 %v2270, %v2358
        %2360 = vmatmul.bf16.gmra.mxu0 %v1044
        %v2361 = vpop.f32.mrf.mxu0
        %v2362 = vadd.f32 %v2273, %v2361
        %v2363 = vpop.f32.mrf.mxu0
        %v2364 = vadd.f32 %v2275, %v2363
        %2365 = vmatmul.bf16.gmra.mxu0 %v1053
        %v2366 = vpop.f32.mrf.mxu0
        %v2367 = vadd.f32 %v2278, %v2366
        %v2368 = vpop.f32.mrf.mxu0
        %v2369 = vadd.f32 %v2280, %v2368
        %2370 = vmatmul.bf16.gmra.mxu0 %v1062
        %v2371 = vpop.f32.mrf.mxu0
        %v2372 = vadd.f32 %v2283, %v2371
        %v2373 = vpop.f32.mrf.mxu0
        %v2374 = vadd.f32 %v2285, %v2373
        %2375 = vmatmul.bf16.gmra.mxu0 %v1071
        %v2376 = vpop.f32.mrf.mxu0
        %v2377 = vadd.f32 %v2288, %v2376
        %v2378 = vpop.f32.mrf.mxu0
        %v2379 = vadd.f32 %v2290, %v2378
        %2380 = vmatmul.bf16.gmra.mxu0 %v1080
        %v2381 = vpop.f32.mrf.mxu0
        %v2382 = vadd.f32 %v2293, %v2381
        %v2383 = vpop.f32.mrf.mxu0
        %v2384 = vadd.f32 %v2295, %v2383
        %2385 = vmatmul.bf16.gmra.mxu0 %v1089
        %v2386 = vpop.f32.mrf.mxu0
        %v2387 = vadd.f32 %v2298, %v2386
        %v2388 = vpop.f32.mrf.mxu0
        %v2389 = vadd.f32 %v2300, %v2388
        %2390 = vmatmul.bf16.gmra.mxu0 %v1098
        %v2391 = vpop.f32.mrf.mxu0
        %v2392 = vadd.f32 %v2303, %v2391
        %v2393 = vpop.f32.mrf.mxu0
        %v2394 = vadd.f32 %v2305, %v2393
        %2395 = vmatmul.bf16.gmra.mxu0 %v1107
        %v2396 = vpop.f32.mrf.mxu0
        %v2397 = vadd.f32 %v2308, %v2396
        %v2398 = vpop.f32.mrf.mxu0
        %v2399 = vadd.f32 %v2310, %v2398
        %2400 = vmatmul.bf16.gmra.mxu0 %v1116
        %v2401 = vpop.f32.mrf.mxu0
        %v2402 = vadd.f32 %v2313, %v2401
        %v2403 = vpop.f32.mrf.mxu0
        %v2404 = vadd.f32 %v2315, %v2403
        %2405 = vdwg.mxu0
        %2406 = vmatpush.bf16.msra.mxu0 %v1621
        %2407 = vmatpush.bf16.msra.mxu0 %v1620
        %2408 = vmatpush.bf16.msra.mxu0 %v1619
        %2409 = vmatpush.bf16.msra.mxu0 %v1618
        %2410 = vmatpush.bf16.msra.mxu0 %v1617
        %2411 = vmatpush.bf16.msra.mxu0 %v1616
        %2412 = vmatpush.bf16.msra.mxu0 %v1615
        %2413 = vmatpush.bf16.msra.mxu0 %v1614
        %2414 = vmatmul.bf16.gmra.mxu0 %v982
        %v2415 = vpop.f32.mrf.mxu0
        %v2416 = vadd.f32 %v2327, %v2415
        %v2417 = vpop.f32.mrf.mxu0
        %v2418 = vadd.f32 %v2329, %v2417
        %2419 = vmatmul.bf16.gmra.mxu0 %v991
        %v2420 = vpop.f32.mrf.mxu0
        %v2421 = vadd.f32 %v2332, %v2420
        %v2422 = vpop.f32.mrf.mxu0
        %v2423 = vadd.f32 %v2334, %v2422
        %2424 = vmatmul.bf16.gmra.mxu0 %v1000
        %v2425 = vpop.f32.mrf.mxu0
        %v2426 = vadd.f32 %v2337, %v2425
        %v2427 = vpop.f32.mrf.mxu0
        %v2428 = vadd.f32 %v2339, %v2427
        %2429 = vmatmul.bf16.gmra.mxu0 %v1009
        %v2430 = vpop.f32.mrf.mxu0
        %v2431 = vadd.f32 %v2342, %v2430
        %v2432 = vpop.f32.mrf.mxu0
        %v2433 = vadd.f32 %v2344, %v2432
        %2434 = vmatmul.bf16.gmra.mxu0 %v1018
        %v2435 = vpop.f32.mrf.mxu0
        %v2436 = vadd.f32 %v2347, %v2435
        %v2437 = vpop.f32.mrf.mxu0
        %v2438 = vadd.f32 %v2349, %v2437
        %2439 = vmatmul.bf16.gmra.mxu0 %v1027
        %v2440 = vpop.f32.mrf.mxu0
        %v2441 = vadd.f32 %v2352, %v2440
        %v2442 = vpop.f32.mrf.mxu0
        %v2443 = vadd.f32 %v2354, %v2442
        %2444 = vmatmul.bf16.gmra.mxu0 %v1036
        %v2445 = vpop.f32.mrf.mxu0
        %v2446 = vadd.f32 %v2357, %v2445
        %v2447 = vpop.f32.mrf.mxu0
        %v2448 = vadd.f32 %v2359, %v2447
        %2449 = vmatmul.bf16.gmra.mxu0 %v1045
        %v2450 = vpop.f32.mrf.mxu0
        %v2451 = vadd.f32 %v2362, %v2450
        %v2452 = vpop.f32.mrf.mxu0
        %v2453 = vadd.f32 %v2364, %v2452
        %2454 = vmatmul.bf16.gmra.mxu0 %v1054
        %v2455 = vpop.f32.mrf.mxu0
        %v2456 = vadd.f32 %v2367, %v2455
        %v2457 = vpop.f32.mrf.mxu0
        %v2458 = vadd.f32 %v2369, %v2457
        %2459 = vmatmul.bf16.gmra.mxu0 %v1063
        %v2460 = vpop.f32.mrf.mxu0
        %v2461 = vadd.f32 %v2372, %v2460
        %v2462 = vpop.f32.mrf.mxu0
        %v2463 = vadd.f32 %v2374, %v2462
        %2464 = vmatmul.bf16.gmra.mxu0 %v1072
        %v2465 = vpop.f32.mrf.mxu0
        %v2466 = vadd.f32 %v2377, %v2465
        %v2467 = vpop.f32.mrf.mxu0
        %v2468 = vadd.f32 %v2379, %v2467
        %2469 = vmatmul.bf16.gmra.mxu0 %v1081
        %v2470 = vpop.f32.mrf.mxu0
        %v2471 = vadd.f32 %v2382, %v2470
        %v2472 = vpop.f32.mrf.mxu0
        %v2473 = vadd.f32 %v2384, %v2472
        %2474 = vmatmul.bf16.gmra.mxu0 %v1090
        %v2475 = vpop.f32.mrf.mxu0
        %v2476 = vadd.f32 %v2387, %v2475
        %v2477 = vpop.f32.mrf.mxu0
        %v2478 = vadd.f32 %v2389, %v2477
        %2479 = vmatmul.bf16.gmra.mxu0 %v1099
        %v2480 = vpop.f32.mrf.mxu0
        %v2481 = vadd.f32 %v2392, %v2480
        %v2482 = vpop.f32.mrf.mxu0
        %v2483 = vadd.f32 %v2394, %v2482
        %2484 = vmatmul.bf16.gmra.mxu0 %v1108
        %v2485 = vpop.f32.mrf.mxu0
        %v2486 = vadd.f32 %v2397, %v2485
        %v2487 = vpop.f32.mrf.mxu0
        %v2488 = vadd.f32 %v2399, %v2487
        %2489 = vmatmul.bf16.gmra.mxu0 %v1117
        %v2490 = vpop.f32.mrf.mxu0
        %v2491 = vadd.f32 %v2402, %v2490
        %v2492 = vpop.f32.mrf.mxu0
        %v2493 = vadd.f32 %v2404, %v2492
        %2494 = vdwg.mxu0
        %v2495 = vmax.f32 %v2416, 0.0
        %v2496 = vmax.f32 %v2418, 0.0
        %v2497 = vmax.f32 %v2421, 0.0
        %v2498 = vmax.f32 %v2423, 0.0
        %v2499 = vmax.f32 %v2426, 0.0
        %v2500 = vmax.f32 %v2428, 0.0
        %v2501 = vmax.f32 %v2431, 0.0
        %v2502 = vmax.f32 %v2433, 0.0
        %v2503 = vmax.f32 %v2436, 0.0
        %v2504 = vmax.f32 %v2438, 0.0
        %v2505 = vmax.f32 %v2441, 0.0
        %v2506 = vmax.f32 %v2443, 0.0
        %v2507 = vmax.f32 %v2446, 0.0
        %v2508 = vmax.f32 %v2448, 0.0
        %v2509 = vmax.f32 %v2451, 0.0
        %v2510 = vmax.f32 %v2453, 0.0
        %v2511 = vmax.f32 %v2456, 0.0
        %v2512 = vmax.f32 %v2458, 0.0
        %v2513 = vmax.f32 %v2461, 0.0
        %v2514 = vmax.f32 %v2463, 0.0
        %v2515 = vmax.f32 %v2466, 0.0
        %v2516 = vmax.f32 %v2468, 0.0
        %v2517 = vmax.f32 %v2471, 0.0
        %v2518 = vmax.f32 %v2473, 0.0
        %v2519 = vmax.f32 %v2476, 0.0
        %v2520 = vmax.f32 %v2478, 0.0
        %v2521 = vmax.f32 %v2481, 0.0
        %v2522 = vmax.f32 %v2483, 0.0
        %v2523 = vmax.f32 %v2486, 0.0
        %v2524 = vmax.f32 %v2488, 0.0
        %v2525 = vmax.f32 %v2491, 0.0
        %v2526 = vmax.f32 %v2493, 0.0
        %2527 = vst [vmem:[%s212] sm:$0xff] %v2495
        %2528 = vst [vmem:[%s212 + $0x8] sm:$0xff] %v2496
        %2529 = vst [vmem:[%s212 + $0x10] sm:$0xff] %v2497
        %2530 = vst [vmem:[%s212 + $0x18] sm:$0xff] %v2498
        %2531 = vst [vmem:[%s212 + $0x20] sm:$0xff] %v2499
        %2532 = vst [vmem:[%s212 + $0x28] sm:$0xff] %v2500
        %2533 = vst [vmem:[%s212 + $0x30] sm:$0xff] %v2501
        %2534 = vst [vmem:[%s212 + $0x38] sm:$0xff] %v2502
        %2535 = vst [vmem:[%s212 + $0x40] sm:$0xff] %v2503
        %2536 = vst [vmem:[%s212 + $0x48] sm:$0xff] %v2504
        %2537 = vst [vmem:[%s212 + $0x50] sm:$0xff] %v2505
        %2538 = vst [vmem:[%s212 + $0x58] sm:$0xff] %v2506
        %2539 = vst [vmem:[%s212 + $0x60] sm:$0xff] %v2507
        %2540 = vst [vmem:[%s212 + $0x68] sm:$0xff] %v2508
        %2541 = vst [vmem:[%s212 + $0x70] sm:$0xff] %v2509
        %2542 = vst [vmem:[%s212 + $0x78] sm:$0xff] %v2510
        %2543 = vst [vmem:[%s212 + $0x80] sm:$0xff] %v2511
        %2544 = vst [vmem:[%s212 + $0x88] sm:$0xff] %v2512
        %2545 = vst [vmem:[%s212 + $0x90] sm:$0xff] %v2513
        %2546 = vst [vmem:[%s212 + $0x98] sm:$0xff] %v2514
        %2547 = vst [vmem:[%s212 + $0xa0] sm:$0xff] %v2515
        %2548 = vst [vmem:[%s212 + $0xa8] sm:$0xff] %v2516
        %2549 = vst [vmem:[%s212 + $0xb0] sm:$0xff] %v2517
        %2550 = vst [vmem:[%s212 + $0xb8] sm:$0xff] %v2518
        %2551 = vst [vmem:[%s212 + $0xc0] sm:$0xff] %v2519
        %2552 = vst [vmem:[%s212 + $0xc8] sm:$0xff] %v2520
        %2553 = vst [vmem:[%s212 + $0xd0] sm:$0xff] %v2521
        %2554 = vst [vmem:[%s212 + $0xd8] sm:$0xff] %v2522
        %2555 = vst [vmem:[%s212 + $0xe0] sm:$0xff] %v2523
        %2556 = vst [vmem:[%s212 + $0xe8] sm:$0xff] %v2524
        %2557 = vst [vmem:[%s212 + $0xf0] sm:$0xff] %v2525
        %2558 = vst [vmem:[%s212 + $0xf8] sm:$0xff] %v2526
        %v2559 = vadd.f32 %v2495, %v2496
        %v2560 = vadd.f32 %v2559, %v2497
        %v2561 = vadd.f32 %v2560, %v2498
        %v2562 = vadd.f32 %v2561, %v2499
        %v2563 = vadd.f32 %v2562, %v2500
        %v2564 = vadd.f32 %v2563, %v2501
        %v2565 = vadd.f32 %v2564, %v2502
        %v2566 = vadd.f32 %v2565, %v2503
        %v2567 = vadd.f32 %v2566, %v2504
        %v2568 = vadd.f32 %v2567, %v2505
        %v2569 = vadd.f32 %v2568, %v2506
        %v2570 = vadd.f32 %v2569, %v2507
        %v2571 = vadd.f32 %v2570, %v2508
        %v2572 = vadd.f32 %v2571, %v2509
        %v2573 = vadd.f32 %v2572, %v2510
        %v2574 = vadd.f32 %v2573, %v2511
        %v2575 = vadd.f32 %v2574, %v2512
        %v2576 = vadd.f32 %v2575, %v2513
        %v2577 = vadd.f32 %v2576, %v2514
        %v2578 = vadd.f32 %v2577, %v2515
        %v2579 = vadd.f32 %v2578, %v2516
        %v2580 = vadd.f32 %v2579, %v2517
        %v2581 = vadd.f32 %v2580, %v2518
        %v2582 = vadd.f32 %v2581, %v2519
        %v2583 = vadd.f32 %v2582, %v2520
        %v2584 = vadd.f32 %v2583, %v2521
        %v2585 = vadd.f32 %v2584, %v2522
        %v2586 = vadd.f32 %v2585, %v2523
        %v2587 = vadd.f32 %v2586, %v2524
        %v2588 = vadd.f32 %v2587, %v2525
        %v2589 = vadd.f32 %v2588, %v2526
        %v2590 = vrot.slane %v2589, 4
        %v2591 = vadd.f32 %v2589, %v2590
        %v2592 = vrot.slane %v2591, 2
        %v2593 = vadd.f32 %v2591, %v2592
        %v2594 = vrot.slane %v2593, 1
        %v2595 = vadd.f32 %v2593, %v2594
        %v2596 = vmul.f32 %v2495, %v2495
        %v2597 = vmul.f32 %v2496, %v2496
        %v2598 = vmul.f32 %v2497, %v2497
        %v2599 = vmul.f32 %v2498, %v2498
        %v2600 = vmul.f32 %v2499, %v2499
        %v2601 = vmul.f32 %v2500, %v2500
        %v2602 = vmul.f32 %v2501, %v2501
        %v2603 = vmul.f32 %v2502, %v2502
        %v2604 = vmul.f32 %v2503, %v2503
        %v2605 = vmul.f32 %v2504, %v2504
        %v2606 = vmul.f32 %v2505, %v2505
        %v2607 = vmul.f32 %v2506, %v2506
        %v2608 = vmul.f32 %v2507, %v2507
        %v2609 = vmul.f32 %v2508, %v2508
        %v2610 = vmul.f32 %v2509, %v2509
        %v2611 = vmul.f32 %v2510, %v2510
        %v2612 = vmul.f32 %v2511, %v2511
        %v2613 = vmul.f32 %v2512, %v2512
        %v2614 = vmul.f32 %v2513, %v2513
        %v2615 = vmul.f32 %v2514, %v2514
        %v2616 = vmul.f32 %v2515, %v2515
        %v2617 = vmul.f32 %v2516, %v2516
        %v2618 = vmul.f32 %v2517, %v2517
        %v2619 = vmul.f32 %v2518, %v2518
        %v2620 = vmul.f32 %v2519, %v2519
        %v2621 = vmul.f32 %v2520, %v2520
        %v2622 = vmul.f32 %v2521, %v2521
        %v2623 = vmul.f32 %v2522, %v2522
        %v2624 = vmul.f32 %v2523, %v2523
        %v2625 = vmul.f32 %v2524, %v2524
        %v2626 = vmul.f32 %v2525, %v2525
        %v2627 = vmul.f32 %v2526, %v2526
        %v2628 = vadd.f32 %v2596, %v2597
        %v2629 = vadd.f32 %v2628, %v2598
        %v2630 = vadd.f32 %v2629, %v2599
        %v2631 = vadd.f32 %v2630, %v2600
        %v2632 = vadd.f32 %v2631, %v2601
        %v2633 = vadd.f32 %v2632, %v2602
        %v2634 = vadd.f32 %v2633, %v2603
        %v2635 = vadd.f32 %v2634, %v2604
        %v2636 = vadd.f32 %v2635, %v2605
        %v2637 = vadd.f32 %v2636, %v2606
        %v2638 = vadd.f32 %v2637, %v2607
        %v2639 = vadd.f32 %v2638, %v2608
        %v2640 = vadd.f32 %v2639, %v2609
        %v2641 = vadd.f32 %v2640, %v2610
        %v2642 = vadd.f32 %v2641, %v2611
        %v2643 = vadd.f32 %v2642, %v2612
        %v2644 = vadd.f32 %v2643, %v2613
        %v2645 = vadd.f32 %v2644, %v2614
        %v2646 = vadd.f32 %v2645, %v2615
        %v2647 = vadd.f32 %v2646, %v2616
        %v2648 = vadd.f32 %v2647, %v2617
        %v2649 = vadd.f32 %v2648, %v2618
        %v2650 = vadd.f32 %v2649, %v2619
        %v2651 = vadd.f32 %v2650, %v2620
        %v2652 = vadd.f32 %v2651, %v2621
        %v2653 = vadd.f32 %v2652, %v2622
        %v2654 = vadd.f32 %v2653, %v2623
        %v2655 = vadd.f32 %v2654, %v2624
        %v2656 = vadd.f32 %v2655, %v2625
        %v2657 = vadd.f32 %v2656, %v2626
        %v2658 = vadd.f32 %v2657, %v2627
        %v2659 = vrot.slane %v2658, 4
        %v2660 = vadd.f32 %v2658, %v2659
        %v2661 = vrot.slane %v2660, 2
        %v2662 = vadd.f32 %v2660, %v2661
        %v2663 = vrot.slane %v2662, 1
        %v2664 = vadd.f32 %v2662, %v2663
        %v2665 = vlaneseq
        %v2666 = vshrl.u32 %v2665, 7
        %vm2667 = vcmp.eq.s32.totalorder %v2666, 0
        %vm2668 = vcmp.eq.s32.totalorder %v2666, 1
        %v2669 = vsel %vm2668, %v2664, 0.0
        %v2670 = vsel %vm2667, %v2595, %v2669
        %2671 = vst [vmem:[%s219] sm:$0xff] %v2670
        %s2672 = sand.u32 %s80, 1
        %s2673 = scalar_lea.sflag [#allocation4], %s2672
        %s2674 = sand.u32 %s80, 1
        %s2675 = smul.addr %s2674, 256
        %s2676 = scalar_lea.vmem [#allocation7], %s2675
        %s2677 = sand.u32 %s106, 1
        %s2678 = scalar_lea.sflag [#allocation9], %s2677
        %s2679 = sand.u32 %s106, 1
        %s2680 = smul.addr %s2679, 8
        %s2681 = scalar_lea.vmem [#allocation8], %s2680
        // Predicated region
        $region37: #{tpu_custom_call.1} parent=27 // pred_check
          %p2682 = pneg %p90
        $region38: #{tpu_custom_call.1} parent=27 // pred_check_branch
          %2684 = sbr.rel (%p2682) target = $region40
        $region39: #{tpu_custom_call.1} parent=27 // pred_region
          %s2685 = smul.u32 32, %s25
          %2687 = vsyncadd %s2673, 0
          %s2688 = smul.addr %s2685, 8
          %s2689 = scalar_lea.hbm %s2, %s2688
          %s2690 = sshll.u32 %s2676, 4
          %s2691 = int_to_ptr.vmem [resolvable:$true] %s2690
          %s2692 = sshll.u32 %s2689, 4
          %s2693 = int_to_ptr.hbm [resolvable:$true] %s2692
          %2698 = dma.vmem_to_hbm [thread:$0]  %s2691, 4096, %s2693, %s2673, 128, 128, 8
        $region40: #{tpu_custom_call.1} parent=27 // pred_fallthru
          _
        // Predicated region
        $region41: #{tpu_custom_call.1} parent=27 // pred_check
          %p2699 = pneg %p116
        $region42: #{tpu_custom_call.1} parent=27 // pred_check_branch
          %2701 = sbr.rel (%p2699) target = $region44
        $region43: #{tpu_custom_call.1} parent=27 // pred_region
          %2703 = vsyncadd %s2678, 0
          %s2704 = smul.addr %s25, 8
          %s2705 = scalar_lea.hbm %s3, %s2704
          %s2707 = sshll.u32 %s2681, 4
          %s2708 = int_to_ptr.vmem [resolvable:$true] %s2707
          %s2709 = sshll.u32 %s2705, 4
          %s2710 = int_to_ptr.hbm [resolvable:$true] %s2709
          %2712 = dma.vmem_to_hbm [thread:$0]  %s2708, 128, %s2710, %s2678
        $region44: #{tpu_custom_call.1} parent=27 // pred_fallthru
          _
      $region28: #{tpu_custom_call.1} parent=5 // pred_fallthru
        _
      %p2713 = scmp.le.s32.totalorder 2, %s20
      // Predicated region
      $region45: #{tpu_custom_call.1} parent=5 // pred_check
        %p2714 = pneg %p2713
      $region46: #{tpu_custom_call.1} parent=5 // pred_check_branch
        %2716 = sbr.rel (%p2714) target = $region48
      $region47: #{tpu_custom_call.1} parent=5 // pred_region
        %s2717 = ssub.s32 %s20, 2
        // Predicated region
        $region49: #{tpu_custom_call.1} parent=47 // pred_check
          %p2718 = pneg %p96
        $region50: #{tpu_custom_call.1} parent=47 // pred_check_branch
          %2720 = sbr.rel (%p2718) target = $region52
        $region51: #{tpu_custom_call.1} parent=47 // pred_region
          %s2721 = sand.u32 %s81, 1
          %s2722 = scalar_lea.sflag [#allocation4], %s2721
          %s2723 = sand.u32 %s81, 1
          %s2724 = smul.addr %s2723, 256
          %s2725 = scalar_lea.vmem [#allocation7], %s2724
          %2727 = dma.done %s2722, 4096
        $region52: #{tpu_custom_call.1} parent=47 // pred_fallthru
          _
        // Predicated region
        $region53: #{tpu_custom_call.1} parent=47 // pred_check
          %p2728 = pneg %p122
        $region54: #{tpu_custom_call.1} parent=47 // pred_check_branch
          %2730 = sbr.rel (%p2728) target = $region56
        $region55: #{tpu_custom_call.1} parent=47 // pred_region
          %s2731 = sand.u32 %s107, 1
          %s2732 = scalar_lea.sflag [#allocation9], %s2731
          %s2733 = sand.u32 %s107, 1
          %s2734 = smul.addr %s2733, 8
          %s2735 = scalar_lea.vmem [#allocation8], %s2734
          %2737 = dma.done %s2732, 128
        $region56: #{tpu_custom_call.1} parent=47 // pred_fallthru
          _
      $region48: #{tpu_custom_call.1} parent=5 // pred_fallthru
        _
    $region6: #{tpu_custom_call.1} parent=1 // loop_footer
      %s24 = sadd.s32 1, %s20
    $region7: #{tpu_custom_call.1} parent=1 // loop_footer_branch
      %19 = sbr.rel target = $region3
    $region8: #{tpu_custom_call.1} parent=1 // loop_exit
      _
    %2738 = vsyncpa [#allocation3], 1
    %s2739 = scalar_lea.sflag [#allocation3], 1
    %2740 = vsyncpa %s2739, 1
    %2741 = vsyncpa [#allocation6], 1
    %2742 = vsyncpa [#allocation4], 1
    %s2743 = scalar_lea.sflag [#allocation4], 1
    %2744 = vsyncpa %s2743, 1
    %2745 = vsyncpa [#allocation9], 1
    %s2746 = scalar_lea.sflag [#allocation9], 1
    %2747 = vsyncpa %s2746, 1

</llo_original>
